<compile_context>
chip_gen: v7x
topology: tpu7x:2x2x1
jax: 0.10.0
libtpu: 0.0.40
codegen_flags: <defaults>
</compile_context>

<pallas_src>
import jax
import jax.numpy as jnp
from jax.experimental import pallas as pl
from jax.experimental.pallas import tpu as pltpu


_VMEM_LIMIT_BYTES = 48 * 1024 * 1024   # scoped VMEM limit; actual plan stays well below
_TC_MAX = 128                          # max channel rows per block
_TL_MAX = 4096                         # max lane width per block (multiple of 128)
_BLOCK_BUDGET_BYTES = 2 * 1024 * 1024  # per-input-block cap (keeps v7x's 64 MiB safe)


# ----------------------------------------------------------------------------
# Small helpers
# ----------------------------------------------------------------------------
def _round_up(x, m):
    return (x + m - 1) // m * m


def _pick_tiles(c_pad, l, itemsize):
    """Pick (tc, tl).

    tl: largest multiple of 128 that divides l and is <= _TL_MAX; if l is not a
        multiple of 128, fall back to the full lane extent (always legal).
    tc: multiple of 8 dividing c_pad, bounded by _TC_MAX and by the per-block
        byte budget so double-buffered inputs stay inside the scoped VMEM plan.
    """
    if l % 128 == 0:
        tl = min(l, _TL_MAX)
        while l % tl != 0:
            tl -= 128
    else:
        tl = l
    tc_cap = max(8, (_BLOCK_BUDGET_BYTES // max(1, tl * itemsize)) // 8 * 8)
    tc = min(c_pad, _TC_MAX, tc_cap)
    while c_pad % tc != 0:
        tc -= 8
    return tc, tl


def _reshape_pad(x):
    """(N,C,H,W) -> (N, C_pad, H*W); zero-pad C to a multiple of 8 when needed."""
    n, c, h, w = x.shape
    l = h * w
    x3 = x.reshape(n, c, l)
    c_pad = _round_up(c, 8)
    if c_pad != c:
        x3 = jnp.pad(x3, ((0, 0), (0, c_pad - c), (0, 0)))
    return x3, c_pad, l


def _sublane_group_sum(d):
    """(tc, tl) -> (8, tl): sum rows in groups of 8 sublanes (pure vreg adds)."""
    tc = d.shape[0]
    gs = d[0:8]
    for k in range(1, tc // 8):
        gs = gs + d[8 * k:8 * (k + 1)]
    return gs


def _compiler_params():
    # Batch axis is "parallel" (megacore on v7x); channel / spatial axes are the
    # reduction carried by the VMEM scratch, so they stay "arbitrary".
    return pltpu.CompilerParams(
        dimension_semantics=("parallel", "arbitrary", "arbitrary"),
        vmem_limit_bytes=_VMEM_LIMIT_BYTES)


# ----------------------------------------------------------------------------
# Kernels
# ----------------------------------------------------------------------------
def _sgrl_fml_kernel(g_ref, o_ref, m_ref, sums_ref, acc_sgrl_ref, acc_fml_ref):
    """One pass over gen/out: accumulate |mask*(g-o)| and |g-o| per batch index.

    g_ref, o_ref : (1, tc, tl) feature tiles (native dtype, upcast here)
    m_ref        : (1, 1,  tl) guidance-mask tile (broadcast over channels)
    sums_ref     : (1, 2, 128) per-batch block — row 0 = masked sum, row 1 = plain
    acc_*_ref    : (8, tl) f32 partial-sum accumulators
    """
    ci = pl.program_id(1)
    li = pl.program_id(2)
    first = (ci == 0) & (li == 0)
    last = (ci == pl.num_programs(1) - 1) & (li == pl.num_programs(2) - 1)

    @pl.when(first)
    def _():
        acc_sgrl_ref[...] = jnp.zeros_like(acc_sgrl_ref)
        acc_fml_ref[...] = jnp.zeros_like(acc_fml_ref)

    g = g_ref[0].astype(jnp.float32)               # (tc, tl)
    o = o_ref[0].astype(jnp.float32)
    d = jnp.abs(g - o)
    gs = _sublane_group_sum(d)                     # (8, tl)
    m = jnp.abs(m_ref[0].astype(jnp.float32))      # (1, tl); |m*d| == |m|*|d|

    acc_fml_ref[...] = acc_fml_ref[...] + gs
    acc_sgrl_ref[...] = acc_sgrl_ref[...] + m * gs

    @pl.when(last)
    def _():
        s0 = jnp.sum(acc_sgrl_ref[...])
        s1 = jnp.sum(acc_fml_ref[...])
        row = jax.lax.broadcasted_iota(jnp.int32, (1, 2, 128), 1)
        sums_ref[...] = jnp.where(row == 0, s0, s1)   # lane-dense full store


def _abs_diff_sum_kernel(g_ref, o_ref, sums_ref, acc_ref):
    """Accumulate |g - o| as an (8, tl) partial sum; reduce on the last step."""
    ci = pl.program_id(1)
    li = pl.program_id(2)
    first = (ci == 0) & (li == 0)
    last = (ci == pl.num_programs(1) - 1) & (li == pl.num_programs(2) - 1)

    @pl.when(first)
    def _():
        acc_ref[...] = jnp.zeros_like(acc_ref)

    g = g_ref[0].astype(jnp.float32)
    o = o_ref[0].astype(jnp.float32)
    acc_ref[...] = acc_ref[...] + _sublane_group_sum(jnp.abs(g - o))

    @pl.when(last)
    def _():
        sums_ref[...] = jnp.broadcast_to(jnp.sum(acc_ref[...]), (1, 1, 128))


def _fml_gac_kernel(g_ref, o_ref, w_ref, fml_ref, gm_ref, om_ref,
                    acc_d_ref, acc_gm_ref, acc_om_ref):
    """Fused r41 pass: FML abs-diff sum + per-channel GAC moments in one read.

    g_ref, o_ref : (1, tc, tl) feature tiles
    w_ref        : (tl, 128) packed meshgrid, columns [u, v, 1, 0...]
    fml_ref      : (1, 1, 128) per-batch abs-diff sum
    gm_ref/om_ref: (1, tc, 128) per-channel moments [Σx·u, Σx·v, Σx, ...]
    acc_d_ref    : (8, tl) f32     abs-diff partial sums (per batch index)
    acc_*m_ref   : (tc, 128) f32   moment accumulators (per channel block)
    """
    ci = pl.program_id(1)
    li = pl.program_id(2)
    nlast_c = pl.num_programs(1) - 1
    nlast_l = pl.num_programs(2) - 1

    @pl.when((ci == 0) & (li == 0))
    def _():
        acc_d_ref[...] = jnp.zeros_like(acc_d_ref)

    @pl.when(li == 0)
    def _():
        acc_gm_ref[...] = jnp.zeros_like(acc_gm_ref)
        acc_om_ref[...] = jnp.zeros_like(acc_om_ref)

    g = g_ref[0].astype(jnp.float32)               # (tc, tl)
    o = o_ref[0].astype(jnp.float32)
    w = w_ref[...]                                 # (tl, 128)

    acc_d_ref[...] = acc_d_ref[...] + _sublane_group_sum(jnp.abs(g - o))
    acc_gm_ref[...] = acc_gm_ref[...] + jnp.dot(g, w, preferred_element_type=jnp.float32)
    acc_om_ref[...] = acc_om_ref[...] + jnp.dot(o, w, preferred_element_type=jnp.float32)

    @pl.when(li == nlast_l)
    def _():
        gm_ref[0] = acc_gm_ref[...]
        om_ref[0] = acc_om_ref[...]

    @pl.when((ci == nlast_c) & (li == nlast_l))
    def _():
        fml_ref[...] = jnp.broadcast_to(jnp.sum(acc_d_ref[...]), (1, 1, 128))


# ----------------------------------------------------------------------------
# pallas_call wrappers
# ----------------------------------------------------------------------------
def _sgrl_fml_sums(g, o, m):
    """Fused single pass over gen/out: (sum|mask*(g-o)|, sum|g-o|)."""
    n, c, h, w = g.shape
    g3, c_pad, l = _reshape_pad(g)
    o3, _, _ = _reshape_pad(o)
    m3 = m[:, :1].reshape(n, 1, l)   # single-channel guidance mask
    tc, tl = _pick_tiles(c_pad, l, g.dtype.itemsize)
    grid = (n, c_pad // tc, l // tl)

    sums = pl.pallas_call(
        _sgrl_fml_kernel,
        out_shape=jax.ShapeDtypeStruct((n, 2, 128), jnp.float32),
        grid_spec=pltpu.PrefetchScalarGridSpec(
            num_scalar_prefetch=0,
            grid=grid,
            in_specs=[
                pl.BlockSpec((1, tc, tl), lambda ni, ci, li: (ni, ci, li)),
                pl.BlockSpec((1, tc, tl), lambda ni, ci, li: (ni, ci, li)),
                pl.BlockSpec((1, 1, tl), lambda ni, ci, li: (ni, 0, li)),
            ],
            out_specs=pl.BlockSpec((1, 2, 128), lambda ni, ci, li: (ni, 0, 0)),
            scratch_shapes=[pltpu.VMEM((8, tl), jnp.float32),
                            pltpu.VMEM((8, tl), jnp.float32)],
        ),
        compiler_params=_compiler_params(),
    )(g3, o3, m3)
    return jnp.sum(sums[:, 0, 0]), jnp.sum(sums[:, 1, 0])


def _abs_diff_sum(g, o):
    """sum |g - o| over the whole feature map."""
    n = g.shape[0]
    g3, c_pad, l = _reshape_pad(g)
    o3, _, _ = _reshape_pad(o)
    tc, tl = _pick_tiles(c_pad, l, g.dtype.itemsize)
    grid = (n, c_pad // tc, l // tl)

    sums = pl.pallas_call(
        _abs_diff_sum_kernel,
        out_shape=jax.ShapeDtypeStruct((n, 1, 128), jnp.float32),
        grid_spec=pltpu.PrefetchScalarGridSpec(
            num_scalar_prefetch=0,
            grid=grid,
            in_specs=[
                pl.BlockSpec((1, tc, tl), lambda ni, ci, li: (ni, ci, li)),
                pl.BlockSpec((1, tc, tl), lambda ni, ci, li: (ni, ci, li)),
            ],
            out_specs=pl.BlockSpec((1, 1, 128), lambda ni, ci, li: (ni, 0, 0)),
            scratch_shapes=[pltpu.VMEM((8, tl), jnp.float32)],
        ),
        compiler_params=_compiler_params(),
    )(g3, o3)
    return jnp.sum(sums[:, 0, 0])


def _fml_gac_sums(g, o):
    """Fused r41 pass: returns (sum|g-o|, gen moments (n,c,3), out moments (n,c,3))."""
    n, c, h, w = g.shape
    g3, c_pad, l = _reshape_pad(g)
    o3, _, _ = _reshape_pad(o)
    tc, tl = _pick_tiles(c_pad, l, g.dtype.itemsize)
    grid = (n, c_pad // tc, l // tl)

    # Packed meshgrid matrix [u, v, 1, 0...]; identical to the PyTorch
    # torch.meshgrid(torch.arange(-1, 1, 1/8)) when h == w == 16.
    # TODO(synk): the PyTorch reference hard-codes the 1/8 step regardless of size.
    cu = jnp.arange(h, dtype=jnp.float32) * (2.0 / h) - 1.0
    cv = jnp.arange(w, dtype=jnp.float32) * (2.0 / w) - 1.0
    u, v = jnp.meshgrid(cu, cv, indexing='ij')
    wmat = jnp.zeros((l, 128), jnp.float32)
    wmat = wmat.at[:, 0].set(u.reshape(-1))
    wmat = wmat.at[:, 1].set(v.reshape(-1))
    wmat = wmat.at[:, 2].set(1.0)

    fml, gmom, omom = pl.pallas_call(
        _fml_gac_kernel,
        out_shape=(jax.ShapeDtypeStruct((n, 1, 128), jnp.float32),
                   jax.ShapeDtypeStruct((n, c_pad, 128), jnp.float32),
                   jax.ShapeDtypeStruct((n, c_pad, 128), jnp.float32)),
        grid_spec=pltpu.PrefetchScalarGridSpec(
            num_scalar_prefetch=0,
            grid=grid,
            in_specs=[
                pl.BlockSpec((1, tc, tl), lambda ni, ci, li: (ni, ci, li)),
                pl.BlockSpec((1, tc, tl), lambda ni, ci, li: (ni, ci, li)),
                pl.BlockSpec((tl, 128), lambda ni, ci, li: (li, 0)),
            ],
            out_specs=[
                pl.BlockSpec((1, 1, 128), lambda ni, ci, li: (ni, 0, 0)),
                pl.BlockSpec((1, tc, 128), lambda ni, ci, li: (ni, ci, 0)),
                pl.BlockSpec((1, tc, 128), lambda ni, ci, li: (ni, ci, 0)),
            ],
            scratch_shapes=[pltpu.VMEM((8, tl), jnp.float32),
                            pltpu.VMEM((tc, 128), jnp.float32),
                            pltpu.VMEM((tc, 128), jnp.float32)],
        ),
        compiler_params=_compiler_params(),
    )(g3, o3, wmat)

    fml_sum = jnp.sum(fml[:, 0, 0])
    return fml_sum, gmom[:, :c, :3], omom[:, :c, :3]


def _gac_from_moments(gmom, omom, n, c):
    """Centroid MSE from per-channel moments [Σx·u, Σx·v, Σx]; tiny, plain JAX."""
    eps = jnp.float32(1e-8)
    # TODO(synk): signed eps guard added for numerical safety; verify the
    # reference's exact division behavior (post-ReLU features make it moot).
    def centroids(mom):
        s = mom[..., 2]
        s = jnp.where(s >= 0, s + eps, s - eps)
        return mom[..., 0] / s, mom[..., 1] / s
    gcu, gcv = centroids(gmom)
    ocu, ocv = centroids(omom)
    return jnp.sum((gcu - ocu) ** 2 + (gcv - ocv) ** 2) / jnp.float32(2 * n * c)


# ----------------------------------------------------------------------------
# Module
# ----------------------------------------------------------------------------
class VggLoss:
    def __init__(self):
        self.GuidedRegressLossFeatures = ['r{}1'.format(i) for i in range(1, 3)]
        self.FeatMatchLossFeatures = ['r{}1'.format(i) for i in range(1, 6)]

    @staticmethod
    def WeightL(layer):
        shape = layer.shape
        # 1000 / (C^3 * H * W) — mirrors the PyTorch WeightL()
        return 1000.0 / float(shape[1] * shape[1] * shape[1] * shape[2] * shape[3])

    @staticmethod
    def _resize_mask(guidanceMask, h, w):
        n, cm, hm, wm = guidanceMask.shape
        if (hm, wm) == (h, w):
            return guidanceMask
        # PyTorch F.interpolate defaults to mode='nearest'.
        # TODO(synk): jax 'nearest' rounding may differ from torch's floor
        # indexing by half a pixel at non-integer scale factors.
        return jax.image.resize(guidanceMask, (n, cm, h, w), method='nearest')

    # ---- standalone methods (API parity with the PyTorch module) ------------
    def SelfGuidedRegressionLoss(self, gen, out, guidanceMask):
        total = jnp.float32(0.0)
        for name in self.GuidedRegressLossFeatures:
            g, o = gen[name], out[name]
            n, c, h, w = g.shape
            m = self._resize_mask(guidanceMask, h, w)
            masked_s, _ = _sgrl_fml_sums(g, o, m)
            total = total + self.WeightL(g) * masked_s / float(n * c * h * w)
        return total

    def GeometricalAlignmentConstraint(self, genR, outR):
        n, c, h, w = genR.shape
        _, gmom, omom = _fml_gac_sums(genR, outR)
        return _gac_from_moments(gmom, omom, n, c)

    def FeatureMatchingLoss(self, gen, out):
        total = jnp.float32(0.0)
        for name in self.FeatMatchLossFeatures:
            g, o = gen[name], out[name]
            n, c, h, w = g.shape
            s = _abs_diff_sum(g, o)
            total = total + self.WeightL(g) * s / float(n * c * h * w)
        return total

    # ---- fused forward -------------------------------------------------------
    def __call__(self, gen, out, guidanceMask):
        # r11/r21: SGRL + FML share one pass over gen/out (fused kernel).
        # r41    : FML + GAC share one pass (fused kernel + MXU moment matmul).
        # r31/r51: plain abs-diff accumulator kernel.
        sgrl = jnp.float32(0.0)
        fml = jnp.float32(0.0)
        gac = jnp.float32(0.0)
        for name in self.FeatMatchLossFeatures:
            g, o = gen[name], out[name]
            n, c, h, w = g.shape
            wl = self.WeightL(g)
            denom = float(n * c * h * w)
            if name in self.GuidedRegressLossFeatures:
                m = self._resize_mask(guidanceMask, h, w)
                masked_s, plain_s = _sgrl_fml_sums(g, o, m)
                sgrl = sgrl + wl * masked_s / denom
                fml = fml + wl * plain_s / denom
            elif name == 'r41':
                plain_s, gmom, omom = _fml_gac_sums(g, o)
                fml = fml + wl * plain_s / denom
                gac = _gac_from_moments(gmom, omom, n, c)
            else:
                s = _abs_diff_sum(g, o)
                fml = fml + wl * s / denom

        Loss = {}
        Loss['SGRL'] = sgrl
        Loss['GAC'] = gac
        Loss['FML'] = fml
        return Loss


# ----------------------------------------------------------------------------
# Demo
# ----------------------------------------------------------------------------
if __name__ == "__main__":
    key = jax.random.PRNGKey(0)

    # Small synthetic VGG feature pyramid (NCHW).
    feat_shapes = {
        'r11': (2, 4, 16, 16),
        'r21': (2, 8, 8, 8),
        'r31': (2, 16, 8, 8),
        'r41': (2, 8, 16, 16),
        'r51': (2, 32, 8, 8),
    }

    gen, out = {}, {}
    for name, shp in feat_shapes.items():
        key, k1, k2 = jax.random.split(key, 3)
        gen[name] = jax.random.uniform(k1, shp, dtype=jnp.float32)
        out[name] = jax.random.uniform(k2, shp, dtype=jnp.float32)

    key, km = jax.random.split(key)
    guidance = jax.random.uniform(km, (2, 1, 16, 16), dtype=jnp.float32)

    loss_fn = VggLoss()
    losses = jax.jit(lambda g, o, m: loss_fn(g, o, m))(gen, out, guidance)
    losses = jax.block_until_ready(losses)
    print("KERNEL_OK")
</pallas_src>

<mosaic_0001>
module attributes {stable_mosaic.version = 11 : i64} {
  func.func @_sgrl_fml_kernel(%arg0: i32, %arg1: i32, %arg2: i32, %arg3: memref<1x8x64xf32, #tpu.memory_space<vmem>>, %arg4: memref<1x8x64xf32, #tpu.memory_space<vmem>>, %arg5: memref<1x1x64xf32, #tpu.memory_space<vmem>>, %arg6: memref<1x2x128xf32, #tpu.memory_space<vmem>>, %arg7: memref<8x64xf32, #tpu.memory_space<vmem>>, %arg8: memref<8x64xf32, #tpu.memory_space<vmem>>) attributes {dimension_semantics = [#tpu.dimension_semantics<parallel>, #tpu.dimension_semantics<arbitrary>, #tpu.dimension_semantics<arbitrary>], iteration_bounds = array<i64: 2, 1, 1>, scalar_prefetch = 0 : i64, scratch_operands = 2 : i64, tpu.core_type = #tpu.core_type<tc>, window_params = [{transform_indices = @transform_0, window_bounds = array<i64: 1, 8, 64>}, {transform_indices = @transform_1, window_bounds = array<i64: 1, 8, 64>}, {transform_indices = @transform_2, window_bounds = array<i64: 1, 1, 64>}, {transform_indices = @transform_3, window_bounds = array<i64: 1, 2, 128>}]} {
    %c0_i32 = arith.constant 0 : i32
    %0 = arith.cmpi eq, %arg1, %c0_i32 : i32
    %c0_i32_0 = arith.constant 0 : i32
    %1 = arith.cmpi eq, %arg2, %c0_i32_0 : i32
    %2 = arith.andi %0, %1 : i1
    %c0_i32_1 = arith.constant 0 : i32
    %3 = arith.cmpi eq, %arg1, %c0_i32_1 : i32
    %c0_i32_2 = arith.constant 0 : i32
    %4 = arith.cmpi eq, %arg2, %c0_i32_2 : i32
    %5 = arith.andi %3, %4 : i1
    %6 = arith.extui %2 : i1 to i32
    %c0_i32_3 = arith.constant 0 : i32
    %7 = arith.cmpi ne, %6, %c0_i32_3 : i32
    scf.if %7 {
      %cst = arith.constant 0.000000e+00 : f32
      %27 = vector.broadcast %cst : f32 to vector<8x64xf32>
      %c0_21 = arith.constant 0 : index
      %c0_22 = arith.constant 0 : index
      %28 = vector.load %arg7[%c0_21, %c0_22] : memref<8x64xf32, #tpu.memory_space<vmem>>, vector<8x64xf32>
      tpu.vector_store %arg7[%c0_21, %c0_22], %27 {strides = array<i32>} : memref<8x64xf32, #tpu.memory_space<vmem>>, vector<8x64xf32>,
      %cst_23 = arith.constant 0.000000e+00 : f32
      %29 = vector.broadcast %cst_23 : f32 to vector<8x64xf32>
      %c0_24 = arith.constant 0 : index
      %c0_25 = arith.constant 0 : index
      %30 = vector.load %arg8[%c0_24, %c0_25] : memref<8x64xf32, #tpu.memory_space<vmem>>, vector<8x64xf32>
      tpu.vector_store %arg8[%c0_24, %c0_25], %29 {strides = array<i32>} : memref<8x64xf32, #tpu.memory_space<vmem>>, vector<8x64xf32>,
    } else {
    }
    %c0 = arith.constant 0 : index
    %c0_4 = arith.constant 0 : index
    %c0_5 = arith.constant 0 : index
    %8 = vector.load %arg3[%c0, %c0_4, %c0_5] : memref<1x8x64xf32, #tpu.memory_space<vmem>>, vector<1x8x64xf32>
    %9 = vector.shape_cast %8 : vector<1x8x64xf32> to vector<8x64xf32>
    %c0_6 = arith.constant 0 : index
    %c0_7 = arith.constant 0 : index
    %c0_8 = arith.constant 0 : index
    %10 = vector.load %arg4[%c0_6, %c0_7, %c0_8] : memref<1x8x64xf32, #tpu.memory_space<vmem>>, vector<1x8x64xf32>
    %11 = vector.shape_cast %10 : vector<1x8x64xf32> to vector<8x64xf32>
    %12 = arith.subf %9, %11 : vector<8x64xf32>
    %13 = math.absf %12 : vector<8x64xf32>
    %c0_9 = arith.constant 0 : index
    %c0_10 = arith.constant 0 : index
    %c0_11 = arith.constant 0 : index
    %14 = vector.load %arg5[%c0_9, %c0_10, %c0_11] : memref<1x1x64xf32, #tpu.memory_space<vmem>>, vector<1x1x64xf32>
    %15 = vector.shape_cast %14 : vector<1x1x64xf32> to vector<1x64xf32>
    %16 = math.absf %15 : vector<1x64xf32>
    %c0_12 = arith.constant 0 : index
    %c0_13 = arith.constant 0 : index
    %17 = vector.load %arg8[%c0_12, %c0_13] : memref<8x64xf32, #tpu.memory_space<vmem>>, vector<8x64xf32>
    %18 = arith.addf %17, %13 : vector<8x64xf32>
    %c0_14 = arith.constant 0 : index
    %c0_15 = arith.constant 0 : index
    %19 = vector.load %arg8[%c0_14, %c0_15] : memref<8x64xf32, #tpu.memory_space<vmem>>, vector<8x64xf32>
    tpu.vector_store %arg8[%c0_14, %c0_15], %18 {strides = array<i32>} : memref<8x64xf32, #tpu.memory_space<vmem>>, vector<8x64xf32>,
    %c0_16 = arith.constant 0 : index
    %c0_17 = arith.constant 0 : index
    %20 = vector.load %arg7[%c0_16, %c0_17] : memref<8x64xf32, #tpu.memory_space<vmem>>, vector<8x64xf32>
    %21 = vector.broadcast %16 : vector<1x64xf32> to vector<8x64xf32>
    %22 = arith.mulf %21, %13 : vector<8x64xf32>
    %23 = arith.addf %20, %22 : vector<8x64xf32>
    %c0_18 = arith.constant 0 : index
    %c0_19 = arith.constant 0 : index
    %24 = vector.load %arg7[%c0_18, %c0_19] : memref<8x64xf32, #tpu.memory_space<vmem>>, vector<8x64xf32>
    tpu.vector_store %arg7[%c0_18, %c0_19], %23 {strides = array<i32>} : memref<8x64xf32, #tpu.memory_space<vmem>>, vector<8x64xf32>,
    %25 = arith.extui %5 : i1 to i32
    %c0_i32_20 = arith.constant 0 : i32
    %26 = arith.cmpi ne, %25, %c0_i32_20 : i32
    scf.if %26 {
      %c0_21 = arith.constant 0 : index
      %c0_22 = arith.constant 0 : index
      %27 = vector.load %arg7[%c0_21, %c0_22] : memref<8x64xf32, #tpu.memory_space<vmem>>, vector<8x64xf32>
      %28 = vector.shape_cast %27 : vector<8x64xf32> to vector<1x8x64xf32>
      %cst = arith.constant dense<0.000000e+00> : vector<1xf32>
      %29 = vector.multi_reduction <add>, %28, %cst [1, 2] : vector<1x8x64xf32> to vector<1xf32>
      %30 = vector.shape_cast %29 : vector<1xf32> to vector<1x1x1xf32>
      %31 = vector.extract %30[0, 0, 0] : f32 from vector<1x1x1xf32>
      %c0_23 = arith.constant 0 : index
      %c0_24 = arith.constant 0 : index
      %32 = vector.load %arg8[%c0_23, %c0_24] : memref<8x64xf32, #tpu.memory_space<vmem>>, vector<8x64xf32>
      %33 = vector.shape_cast %32 : vector<8x64xf32> to vector<1x8x64xf32>
      %cst_25 = arith.constant dense<0.000000e+00> : vector<1xf32>
      %34 = vector.multi_reduction <add>, %33, %cst_25 [1, 2] : vector<1x8x64xf32> to vector<1xf32>
      %35 = vector.shape_cast %34 : vector<1xf32> to vector<1x1x1xf32>
      %36 = vector.extract %35[0, 0, 0] : f32 from vector<1x1x1xf32>
      %37 = tpu.iota {dimensions = array<i32: 1>} : vector<1x2x128xi32>
      %c0_i32_26 = arith.constant 0 : i32
      %38 = vector.broadcast %c0_i32_26 : i32 to vector<1x2x128xi32>
      %39 = arith.cmpi eq, %37, %38 : vector<1x2x128xi32>
      %40 = vector.broadcast %31 : f32 to vector<1x2x128xf32>
      %41 = vector.broadcast %36 : f32 to vector<1x2x128xf32>
      %42 = arith.select %39, %40, %41 : vector<1x2x128xi1>, vector<1x2x128xf32>
      %c0_27 = arith.constant 0 : index
      %c0_28 = arith.constant 0 : index
      %c0_29 = arith.constant 0 : index
      %43 = vector.load %arg6[%c0_27, %c0_28, %c0_29] : memref<1x2x128xf32, #tpu.memory_space<vmem>>, vector<1x2x128xf32>
      tpu.vector_store %arg6[%c0_27, %c0_28, %c0_29], %42 {strides = array<i32>} : memref<1x2x128xf32, #tpu.memory_space<vmem>>, vector<1x2x128xf32>,
    } else {
    }
    return
  }
  func.func @transform_0(%arg0: i32, %arg1: i32, %arg2: i32) -> (i32, i32, i32) {
    %c0_i32 = arith.constant 0 : i32
    return %arg0, %arg1, %arg2 : i32, i32, i32
  }
  func.func @transform_1(%arg0: i32, %arg1: i32, %arg2: i32) -> (i32, i32, i32) {
    %c0_i32 = arith.constant 0 : i32
    return %arg0, %arg1, %arg2 : i32, i32, i32
  }
  func.func @transform_2(%arg0: i32, %arg1: i32, %arg2: i32) -> (i32, i32, i32) {
    %c0_i32 = arith.constant 0 : i32
    %c0_i32_0 = arith.constant 0 : i32
    return %arg0, %c0_i32, %arg2 : i32, i32, i32
  }
  func.func @transform_3(%arg0: i32, %arg1: i32, %arg2: i32) -> (i32, i32, i32) {
    %c0_i32 = arith.constant 0 : i32
    %c0_i32_0 = arith.constant 0 : i32
    %c0_i32_1 = arith.constant 0 : i32
    return %arg0, %c0_i32, %c0_i32_0 : i32, i32, i32
  }
}

module attributes {stable_mosaic.version = 11 : i64} {
  func.func @_sgrl_fml_kernel(%arg0: i32, %arg1: i32, %arg2: i32, %arg3: memref<1x8x256xf32, #tpu.memory_space<vmem>>, %arg4: memref<1x8x256xf32, #tpu.memory_space<vmem>>, %arg5: memref<1x1x256xf32, #tpu.memory_space<vmem>>, %arg6: memref<1x2x128xf32, #tpu.memory_space<vmem>>, %arg7: memref<8x256xf32, #tpu.memory_space<vmem>>, %arg8: memref<8x256xf32, #tpu.memory_space<vmem>>) attributes {dimension_semantics = [#tpu.dimension_semantics<parallel>, #tpu.dimension_semantics<arbitrary>, #tpu.dimension_semantics<arbitrary>], iteration_bounds = array<i64: 2, 1, 1>, scalar_prefetch = 0 : i64, scratch_operands = 2 : i64, tpu.core_type = #tpu.core_type<tc>, window_params = [{transform_indices = @transform_0, window_bounds = array<i64: 1, 8, 256>}, {transform_indices = @transform_1, window_bounds = array<i64: 1, 8, 256>}, {transform_indices = @transform_2, window_bounds = array<i64: 1, 1, 256>}, {transform_indices = @transform_3, window_bounds = array<i64: 1, 2, 128>}]} {
    %c0_i32 = arith.constant 0 : i32
    %0 = arith.cmpi eq, %arg1, %c0_i32 : i32
    %c0_i32_0 = arith.constant 0 : i32
    %1 = arith.cmpi eq, %arg2, %c0_i32_0 : i32
    %2 = arith.andi %0, %1 : i1
    %c0_i32_1 = arith.constant 0 : i32
    %3 = arith.cmpi eq, %arg1, %c0_i32_1 : i32
    %c0_i32_2 = arith.constant 0 : i32
    %4 = arith.cmpi eq, %arg2, %c0_i32_2 : i32
    %5 = arith.andi %3, %4 : i1
    %6 = arith.extui %2 : i1 to i32
    %c0_i32_3 = arith.constant 0 : i32
    %7 = arith.cmpi ne, %6, %c0_i32_3 : i32
    scf.if %7 {
      %cst = arith.constant 0.000000e+00 : f32
      %27 = vector.broadcast %cst : f32 to vector<8x256xf32>
      %c0_21 = arith.constant 0 : index
      %c0_22 = arith.constant 0 : index
      %28 = vector.load %arg7[%c0_21, %c0_22] : memref<8x256xf32, #tpu.memory_space<vmem>>, vector<8x256xf32>
      tpu.vector_store %arg7[%c0_21, %c0_22], %27 {strides = array<i32>} : memref<8x256xf32, #tpu.memory_space<vmem>>, vector<8x256xf32>,
      %cst_23 = arith.constant 0.000000e+00 : f32
      %29 = vector.broadcast %cst_23 : f32 to vector<8x256xf32>
      %c0_24 = arith.constant 0 : index
      %c0_25 = arith.constant 0 : index
      %30 = vector.load %arg8[%c0_24, %c0_25] : memref<8x256xf32, #tpu.memory_space<vmem>>, vector<8x256xf32>
      tpu.vector_store %arg8[%c0_24, %c0_25], %29 {strides = array<i32>} : memref<8x256xf32, #tpu.memory_space<vmem>>, vector<8x256xf32>,
    } else {
    }
    %c0 = arith.constant 0 : index
    %c0_4 = arith.constant 0 : index
    %c0_5 = arith.constant 0 : index
    %8 = vector.load %arg3[%c0, %c0_4, %c0_5] : memref<1x8x256xf32, #tpu.memory_space<vmem>>, vector<1x8x256xf32>
    %9 = vector.shape_cast %8 : vector<1x8x256xf32> to vector<8x256xf32>
    %c0_6 = arith.constant 0 : index
    %c0_7 = arith.constant 0 : index
    %c0_8 = arith.constant 0 : index
    %10 = vector.load %arg4[%c0_6, %c0_7, %c0_8] : memref<1x8x256xf32, #tpu.memory_space<vmem>>, vector<1x8x256xf32>
    %11 = vector.shape_cast %10 : vector<1x8x256xf32> to vector<8x256xf32>
    %12 = arith.subf %9, %11 : vector<8x256xf32>
    %13 = math.absf %12 : vector<8x256xf32>
    %c0_9 = arith.constant 0 : index
    %c0_10 = arith.constant 0 : index
    %c0_11 = arith.constant 0 : index
    %14 = vector.load %arg5[%c0_9, %c0_10, %c0_11] : memref<1x1x256xf32, #tpu.memory_space<vmem>>, vector<1x1x256xf32>
    %15 = vector.shape_cast %14 : vector<1x1x256xf32> to vector<1x256xf32>
    %16 = math.absf %15 : vector<1x256xf32>
    %c0_12 = arith.constant 0 : index
    %c0_13 = arith.constant 0 : index
    %17 = vector.load %arg8[%c0_12, %c0_13] : memref<8x256xf32, #tpu.memory_space<vmem>>, vector<8x256xf32>
    %18 = arith.addf %17, %13 : vector<8x256xf32>
    %c0_14 = arith.constant 0 : index
    %c0_15 = arith.constant 0 : index
    %19 = vector.load %arg8[%c0_14, %c0_15] : memref<8x256xf32, #tpu.memory_space<vmem>>, vector<8x256xf32>
    tpu.vector_store %arg8[%c0_14, %c0_15], %18 {strides = array<i32>} : memref<8x256xf32, #tpu.memory_space<vmem>>, vector<8x256xf32>,
    %c0_16 = arith.constant 0 : index
    %c0_17 = arith.constant 0 : index
    %20 = vector.load %arg7[%c0_16, %c0_17] : memref<8x256xf32, #tpu.memory_space<vmem>>, vector<8x256xf32>
    %21 = vector.broadcast %16 : vector<1x256xf32> to vector<8x256xf32>
    %22 = arith.mulf %21, %13 : vector<8x256xf32>
    %23 = arith.addf %20, %22 : vector<8x256xf32>
    %c0_18 = arith.constant 0 : index
    %c0_19 = arith.constant 0 : index
    %24 = vector.load %arg7[%c0_18, %c0_19] : memref<8x256xf32, #tpu.memory_space<vmem>>, vector<8x256xf32>
    tpu.vector_store %arg7[%c0_18, %c0_19], %23 {strides = array<i32>} : memref<8x256xf32, #tpu.memory_space<vmem>>, vector<8x256xf32>,
    %25 = arith.extui %5 : i1 to i32
    %c0_i32_20 = arith.constant 0 : i32
    %26 = arith.cmpi ne, %25, %c0_i32_20 : i32
    scf.if %26 {
      %c0_21 = arith.constant 0 : index
      %c0_22 = arith.constant 0 : index
      %27 = vector.load %arg7[%c0_21, %c0_22] : memref<8x256xf32, #tpu.memory_space<vmem>>, vector<8x256xf32>
      %28 = vector.shape_cast %27 : vector<8x256xf32> to vector<1x8x256xf32>
      %cst = arith.constant dense<0.000000e+00> : vector<1xf32>
      %29 = vector.multi_reduction <add>, %28, %cst [1, 2] : vector<1x8x256xf32> to vector<1xf32>
      %30 = vector.shape_cast %29 : vector<1xf32> to vector<1x1x1xf32>
      %31 = vector.extract %30[0, 0, 0] : f32 from vector<1x1x1xf32>
      %c0_23 = arith.constant 0 : index
      %c0_24 = arith.constant 0 : index
      %32 = vector.load %arg8[%c0_23, %c0_24] : memref<8x256xf32, #tpu.memory_space<vmem>>, vector<8x256xf32>
      %33 = vector.shape_cast %32 : vector<8x256xf32> to vector<1x8x256xf32>
      %cst_25 = arith.constant dense<0.000000e+00> : vector<1xf32>
      %34 = vector.multi_reduction <add>, %33, %cst_25 [1, 2] : vector<1x8x256xf32> to vector<1xf32>
      %35 = vector.shape_cast %34 : vector<1xf32> to vector<1x1x1xf32>
      %36 = vector.extract %35[0, 0, 0] : f32 from vector<1x1x1xf32>
      %37 = tpu.iota {dimensions = array<i32: 1>} : vector<1x2x128xi32>
      %c0_i32_26 = arith.constant 0 : i32
      %38 = vector.broadcast %c0_i32_26 : i32 to vector<1x2x128xi32>
      %39 = arith.cmpi eq, %37, %38 : vector<1x2x128xi32>
      %40 = vector.broadcast %31 : f32 to vector<1x2x128xf32>
      %41 = vector.broadcast %36 : f32 to vector<1x2x128xf32>
      %42 = arith.select %39, %40, %41 : vector<1x2x128xi1>, vector<1x2x128xf32>
      %c0_27 = arith.constant 0 : index
      %c0_28 = arith.constant 0 : index
      %c0_29 = arith.constant 0 : index
      %43 = vector.load %arg6[%c0_27, %c0_28, %c0_29] : memref<1x2x128xf32, #tpu.memory_space<vmem>>, vector<1x2x128xf32>
      tpu.vector_store %arg6[%c0_27, %c0_28, %c0_29], %42 {strides = array<i32>} : memref<1x2x128xf32, #tpu.memory_space<vmem>>, vector<1x2x128xf32>,
    } else {
    }
    return
  }
  func.func @transform_0(%arg0: i32, %arg1: i32, %arg2: i32) -> (i32, i32, i32) {
    %c0_i32 = arith.constant 0 : i32
    return %arg0, %arg1, %arg2 : i32, i32, i32
  }
  func.func @transform_1(%arg0: i32, %arg1: i32, %arg2: i32) -> (i32, i32, i32) {
    %c0_i32 = arith.constant 0 : i32
    return %arg0, %arg1, %arg2 : i32, i32, i32
  }
  func.func @transform_2(%arg0: i32, %arg1: i32, %arg2: i32) -> (i32, i32, i32) {
    %c0_i32 = arith.constant 0 : i32
    %c0_i32_0 = arith.constant 0 : i32
    return %arg0, %c0_i32, %arg2 : i32, i32, i32
  }
  func.func @transform_3(%arg0: i32, %arg1: i32, %arg2: i32) -> (i32, i32, i32) {
    %c0_i32 = arith.constant 0 : i32
    %c0_i32_0 = arith.constant 0 : i32
    %c0_i32_1 = arith.constant 0 : i32
    return %arg0, %c0_i32, %c0_i32_0 : i32, i32, i32
  }
}

module attributes {stable_mosaic.version = 11 : i64} {
  func.func @_abs_diff_sum_kernel(%arg0: i32, %arg1: i32, %arg2: i32, %arg3: memref<1x16x64xf32, #tpu.memory_space<vmem>>, %arg4: memref<1x16x64xf32, #tpu.memory_space<vmem>>, %arg5: memref<1x1x128xf32, #tpu.memory_space<vmem>>, %arg6: memref<8x64xf32, #tpu.memory_space<vmem>>) attributes {dimension_semantics = [#tpu.dimension_semantics<parallel>, #tpu.dimension_semantics<arbitrary>, #tpu.dimension_semantics<arbitrary>], iteration_bounds = array<i64: 2, 1, 1>, scalar_prefetch = 0 : i64, scratch_operands = 1 : i64, tpu.core_type = #tpu.core_type<tc>, window_params = [{transform_indices = @transform_0, window_bounds = array<i64: 1, 16, 64>}, {transform_indices = @transform_1, window_bounds = array<i64: 1, 16, 64>}, {transform_indices = @transform_2, window_bounds = array<i64: 1, 1, 128>}]} {
    %c0_i32 = arith.constant 0 : i32
    %0 = arith.cmpi eq, %arg1, %c0_i32 : i32
    %c0_i32_0 = arith.constant 0 : i32
    %1 = arith.cmpi eq, %arg2, %c0_i32_0 : i32
    %2 = arith.andi %0, %1 : i1
    %c0_i32_1 = arith.constant 0 : i32
    %3 = arith.cmpi eq, %arg1, %c0_i32_1 : i32
    %c0_i32_2 = arith.constant 0 : i32
    %4 = arith.cmpi eq, %arg2, %c0_i32_2 : i32
    %5 = arith.andi %3, %4 : i1
    %6 = arith.extui %2 : i1 to i32
    %c0_i32_3 = arith.constant 0 : i32
    %7 = arith.cmpi ne, %6, %c0_i32_3 : i32
    scf.if %7 {
      %cst = arith.constant 0.000000e+00 : f32
      %22 = vector.broadcast %cst : f32 to vector<8x64xf32>
      %c0_14 = arith.constant 0 : index
      %c0_15 = arith.constant 0 : index
      %23 = vector.load %arg6[%c0_14, %c0_15] : memref<8x64xf32, #tpu.memory_space<vmem>>, vector<8x64xf32>
      tpu.vector_store %arg6[%c0_14, %c0_15], %22 {strides = array<i32>} : memref<8x64xf32, #tpu.memory_space<vmem>>, vector<8x64xf32>,
    } else {
    }
    %c0 = arith.constant 0 : index
    %c0_4 = arith.constant 0 : index
    %c0_5 = arith.constant 0 : index
    %8 = vector.load %arg3[%c0, %c0_4, %c0_5] : memref<1x16x64xf32, #tpu.memory_space<vmem>>, vector<1x16x64xf32>
    %9 = vector.shape_cast %8 : vector<1x16x64xf32> to vector<16x64xf32>
    %c0_6 = arith.constant 0 : index
    %c0_7 = arith.constant 0 : index
    %c0_8 = arith.constant 0 : index
    %10 = vector.load %arg4[%c0_6, %c0_7, %c0_8] : memref<1x16x64xf32, #tpu.memory_space<vmem>>, vector<1x16x64xf32>
    %11 = vector.shape_cast %10 : vector<1x16x64xf32> to vector<16x64xf32>
    %c0_9 = arith.constant 0 : index
    %c0_10 = arith.constant 0 : index
    %12 = vector.load %arg6[%c0_9, %c0_10] : memref<8x64xf32, #tpu.memory_space<vmem>>, vector<8x64xf32>
    %13 = arith.subf %9, %11 : vector<16x64xf32>
    %14 = math.absf %13 : vector<16x64xf32>
    %15 = vector.extract_strided_slice %14 {offsets = [0, 0], sizes = [8, 64], strides = [1, 1]} : vector<16x64xf32> to vector<8x64xf32>
    %16 = vector.extract_strided_slice %14 {offsets = [8, 0], sizes = [8, 64], strides = [1, 1]} : vector<16x64xf32> to vector<8x64xf32>
    %17 = arith.addf %15, %16 : vector<8x64xf32>
    %18 = arith.addf %12, %17 : vector<8x64xf32>
    %c0_11 = arith.constant 0 : index
    %c0_12 = arith.constant 0 : index
    %19 = vector.load %arg6[%c0_11, %c0_12] : memref<8x64xf32, #tpu.memory_space<vmem>>, vector<8x64xf32>
    tpu.vector_store %arg6[%c0_11, %c0_12], %18 {strides = array<i32>} : memref<8x64xf32, #tpu.memory_space<vmem>>, vector<8x64xf32>,
    %20 = arith.extui %5 : i1 to i32
    %c0_i32_13 = arith.constant 0 : i32
    %21 = arith.cmpi ne, %20, %c0_i32_13 : i32
    scf.if %21 {
      %c0_14 = arith.constant 0 : index
      %c0_15 = arith.constant 0 : index
      %22 = vector.load %arg6[%c0_14, %c0_15] : memref<8x64xf32, #tpu.memory_space<vmem>>, vector<8x64xf32>
      %23 = vector.shape_cast %22 : vector<8x64xf32> to vector<1x8x64xf32>
      %cst = arith.constant dense<0.000000e+00> : vector<1xf32>
      %24 = vector.multi_reduction <add>, %23, %cst [1, 2] : vector<1x8x64xf32> to vector<1xf32>
      %25 = vector.shape_cast %24 : vector<1xf32> to vector<1x1x1xf32>
      %26 = vector.extract %25[0, 0, 0] : f32 from vector<1x1x1xf32>
      %27 = vector.broadcast %26 : f32 to vector<1x1x128xf32>
      %c0_16 = arith.constant 0 : index
      %c0_17 = arith.constant 0 : index
      %c0_18 = arith.constant 0 : index
      %28 = vector.load %arg5[%c0_16, %c0_17, %c0_18] : memref<1x1x128xf32, #tpu.memory_space<vmem>>, vector<1x1x128xf32>
      tpu.vector_store %arg5[%c0_16, %c0_17, %c0_18], %27 {strides = array<i32>} : memref<1x1x128xf32, #tpu.memory_space<vmem>>, vector<1x1x128xf32>,
    } else {
    }
    return
  }
  func.func @transform_0(%arg0: i32, %arg1: i32, %arg2: i32) -> (i32, i32, i32) {
    %c0_i32 = arith.constant 0 : i32
    return %arg0, %arg1, %arg2 : i32, i32, i32
  }
  func.func @transform_1(%arg0: i32, %arg1: i32, %arg2: i32) -> (i32, i32, i32) {
    %c0_i32 = arith.constant 0 : i32
    return %arg0, %arg1, %arg2 : i32, i32, i32
  }
  func.func @transform_2(%arg0: i32, %arg1: i32, %arg2: i32) -> (i32, i32, i32) {
    %c0_i32 = arith.constant 0 : i32
    %c0_i32_0 = arith.constant 0 : i32
    %c0_i32_1 = arith.constant 0 : i32
    return %arg0, %c0_i32, %c0_i32_0 : i32, i32, i32
  }
}

module attributes {stable_mosaic.version = 11 : i64} {
  func.func @_fml_gac_kernel(%arg0: i32, %arg1: i32, %arg2: i32, %arg3: memref<1x8x256xf32, #tpu.memory_space<vmem>>, %arg4: memref<1x8x256xf32, #tpu.memory_space<vmem>>, %arg5: memref<256x128xf32, #tpu.memory_space<vmem>>, %arg6: memref<1x1x128xf32, #tpu.memory_space<vmem>>, %arg7: memref<1x8x128xf32, #tpu.memory_space<vmem>>, %arg8: memref<1x8x128xf32, #tpu.memory_space<vmem>>, %arg9: memref<8x256xf32, #tpu.memory_space<vmem>>, %arg10: memref<8x128xf32, #tpu.memory_space<vmem>>, %arg11: memref<8x128xf32, #tpu.memory_space<vmem>>) attributes {dimension_semantics = [#tpu.dimension_semantics<parallel>, #tpu.dimension_semantics<arbitrary>, #tpu.dimension_semantics<arbitrary>], iteration_bounds = array<i64: 2, 1, 1>, scalar_prefetch = 0 : i64, scratch_operands = 3 : i64, tpu.core_type = #tpu.core_type<tc>, window_params = [{transform_indices = @transform_0, window_bounds = array<i64: 1, 8, 256>}, {transform_indices = @transform_1, window_bounds = array<i64: 1, 8, 256>}, {transform_indices = @transform_2, window_bounds = array<i64: 256, 128>}, {transform_indices = @transform_3, window_bounds = array<i64: 1, 1, 128>}, {transform_indices = @transform_4, window_bounds = array<i64: 1, 8, 128>}, {transform_indices = @transform_5, window_bounds = array<i64: 1, 8, 128>}]} {
    %c0_i32 = arith.constant 0 : i32
    %0 = arith.cmpi eq, %arg1, %c0_i32 : i32
    %c0_i32_0 = arith.constant 0 : i32
    %1 = arith.cmpi eq, %arg2, %c0_i32_0 : i32
    %2 = arith.andi %0, %1 : i1
    %3 = arith.extui %2 : i1 to i32
    %c0_i32_1 = arith.constant 0 : i32
    %4 = arith.cmpi ne, %3, %c0_i32_1 : i32
    scf.if %4 {
      %cst_29 = arith.constant 0.000000e+00 : f32
      %34 = vector.broadcast %cst_29 : f32 to vector<8x256xf32>
      %c0_30 = arith.constant 0 : index
      %c0_31 = arith.constant 0 : index
      %35 = vector.load %arg9[%c0_30, %c0_31] : memref<8x256xf32, #tpu.memory_space<vmem>>, vector<8x256xf32>
      tpu.vector_store %arg9[%c0_30, %c0_31], %34 {strides = array<i32>} : memref<8x256xf32, #tpu.memory_space<vmem>>, vector<8x256xf32>,
    } else {
    }
    %c0_i32_2 = arith.constant 0 : i32
    %5 = arith.cmpi eq, %arg2, %c0_i32_2 : i32
    %6 = arith.extui %5 : i1 to i32
    %c0_i32_3 = arith.constant 0 : i32
    %7 = arith.cmpi ne, %6, %c0_i32_3 : i32
    scf.if %7 {
      %cst_29 = arith.constant 0.000000e+00 : f32
      %34 = vector.broadcast %cst_29 : f32 to vector<8x128xf32>
      %c0_30 = arith.constant 0 : index
      %c0_31 = arith.constant 0 : index
      %35 = vector.load %arg10[%c0_30, %c0_31] : memref<8x128xf32, #tpu.memory_space<vmem>>, vector<8x128xf32>
      tpu.vector_store %arg10[%c0_30, %c0_31], %34 {strides = array<i32>} : memref<8x128xf32, #tpu.memory_space<vmem>>, vector<8x128xf32>,
      %cst_32 = arith.constant 0.000000e+00 : f32
      %36 = vector.broadcast %cst_32 : f32 to vector<8x128xf32>
      %c0_33 = arith.constant 0 : index
      %c0_34 = arith.constant 0 : index
      %37 = vector.load %arg11[%c0_33, %c0_34] : memref<8x128xf32, #tpu.memory_space<vmem>>, vector<8x128xf32>
      tpu.vector_store %arg11[%c0_33, %c0_34], %36 {strides = array<i32>} : memref<8x128xf32, #tpu.memory_space<vmem>>, vector<8x128xf32>,
    } else {
    }
    %c0 = arith.constant 0 : index
    %c0_4 = arith.constant 0 : index
    %c0_5 = arith.constant 0 : index
    %8 = vector.load %arg3[%c0, %c0_4, %c0_5] : memref<1x8x256xf32, #tpu.memory_space<vmem>>, vector<1x8x256xf32>
    %9 = vector.shape_cast %8 : vector<1x8x256xf32> to vector<8x256xf32>
    %c0_6 = arith.constant 0 : index
    %c0_7 = arith.constant 0 : index
    %c0_8 = arith.constant 0 : index
    %10 = vector.load %arg4[%c0_6, %c0_7, %c0_8] : memref<1x8x256xf32, #tpu.memory_space<vmem>>, vector<1x8x256xf32>
    %11 = vector.shape_cast %10 : vector<1x8x256xf32> to vector<8x256xf32>
    %c0_9 = arith.constant 0 : index
    %c0_10 = arith.constant 0 : index
    %12 = vector.load %arg5[%c0_9, %c0_10] : memref<256x128xf32, #tpu.memory_space<vmem>>, vector<256x128xf32>
    %c0_11 = arith.constant 0 : index
    %c0_12 = arith.constant 0 : index
    %13 = vector.load %arg9[%c0_11, %c0_12] : memref<8x256xf32, #tpu.memory_space<vmem>>, vector<8x256xf32>
    %14 = arith.subf %9, %11 : vector<8x256xf32>
    %15 = math.absf %14 : vector<8x256xf32>
    %16 = arith.addf %13, %15 : vector<8x256xf32>
    %c0_13 = arith.constant 0 : index
    %c0_14 = arith.constant 0 : index
    %17 = vector.load %arg9[%c0_13, %c0_14] : memref<8x256xf32, #tpu.memory_space<vmem>>, vector<8x256xf32>
    tpu.vector_store %arg9[%c0_13, %c0_14], %16 {strides = array<i32>} : memref<8x256xf32, #tpu.memory_space<vmem>>, vector<8x256xf32>,
    %c0_15 = arith.constant 0 : index
    %c0_16 = arith.constant 0 : index
    %18 = vector.load %arg10[%c0_15, %c0_16] : memref<8x128xf32, #tpu.memory_space<vmem>>, vector<8x128xf32>
    %cst = arith.constant dense<0.000000e+00> : vector<8x128xf32>
    %19 = tpu.matmul %9, %12, %cst {dimension_numbers = #tpu.dot_dimension_numbers<[1], [0], [0], [1], [0, 0, 1, 1], [], []>} : vector<8x256xf32>, vector<256x128xf32>, vector<8x128xf32> -> vector<8x128xf32>
    %20 = arith.addf %18, %19 : vector<8x128xf32>
    %c0_17 = arith.constant 0 : index
    %c0_18 = arith.constant 0 : index
    %21 = vector.load %arg10[%c0_17, %c0_18] : memref<8x128xf32, #tpu.memory_space<vmem>>, vector<8x128xf32>
    tpu.vector_store %arg10[%c0_17, %c0_18], %20 {strides = array<i32>} : memref<8x128xf32, #tpu.memory_space<vmem>>, vector<8x128xf32>,
    %c0_19 = arith.constant 0 : index
    %c0_20 = arith.constant 0 : index
    %22 = vector.load %arg11[%c0_19, %c0_20] : memref<8x128xf32, #tpu.memory_space<vmem>>, vector<8x128xf32>
    %cst_21 = arith.constant dense<0.000000e+00> : vector<8x128xf32>
    %23 = tpu.matmul %11, %12, %cst_21 {dimension_numbers = #tpu.dot_dimension_numbers<[1], [0], [0], [1], [0, 0, 1, 1], [], []>} : vector<8x256xf32>, vector<256x128xf32>, vector<8x128xf32> -> vector<8x128xf32>
    %24 = arith.addf %22, %23 : vector<8x128xf32>
    %c0_22 = arith.constant 0 : index
    %c0_23 = arith.constant 0 : index
    %25 = vector.load %arg11[%c0_22, %c0_23] : memref<8x128xf32, #tpu.memory_space<vmem>>, vector<8x128xf32>
    tpu.vector_store %arg11[%c0_22, %c0_23], %24 {strides = array<i32>} : memref<8x128xf32, #tpu.memory_space<vmem>>, vector<8x128xf32>,
    %c0_i32_24 = arith.constant 0 : i32
    %26 = arith.cmpi eq, %arg2, %c0_i32_24 : i32
    %27 = arith.extui %26 : i1 to i32
    %c0_i32_25 = arith.constant 0 : i32
    %28 = arith.cmpi ne, %27, %c0_i32_25 : i32
    scf.if %28 {
      %c0_29 = arith.constant 0 : index
      %c0_30 = arith.constant 0 : index
      %34 = vector.load %arg10[%c0_29, %c0_30] : memref<8x128xf32, #tpu.memory_space<vmem>>, vector<8x128xf32>
      %c0_31 = arith.constant 0 : index
      %c0_32 = arith.constant 0 : index
      %c0_33 = arith.constant 0 : index
      %35 = vector.load %arg7[%c0_31, %c0_32, %c0_33] : memref<1x8x128xf32, #tpu.memory_space<vmem>>, vector<1x8x128xf32>
      %36 = vector.shape_cast %35 : vector<1x8x128xf32> to vector<8x128xf32>
      %37 = vector.shape_cast %34 : vector<8x128xf32> to vector<1x8x128xf32>
      tpu.vector_store %arg7[%c0_31, %c0_32, %c0_33], %37 {strides = array<i32>} : memref<1x8x128xf32, #tpu.memory_space<vmem>>, vector<1x8x128xf32>,
      %c0_34 = arith.constant 0 : index
      %c0_35 = arith.constant 0 : index
      %38 = vector.load %arg11[%c0_34, %c0_35] : memref<8x128xf32, #tpu.memory_space<vmem>>, vector<8x128xf32>
      %c0_36 = arith.constant 0 : index
      %c0_37 = arith.constant 0 : index
      %c0_38 = arith.constant 0 : index
      %39 = vector.load %arg8[%c0_36, %c0_37, %c0_38] : memref<1x8x128xf32, #tpu.memory_space<vmem>>, vector<1x8x128xf32>
      %40 = vector.shape_cast %39 : vector<1x8x128xf32> to vector<8x128xf32>
      %41 = vector.shape_cast %38 : vector<8x128xf32> to vector<1x8x128xf32>
      tpu.vector_store %arg8[%c0_36, %c0_37, %c0_38], %41 {strides = array<i32>} : memref<1x8x128xf32, #tpu.memory_space<vmem>>, vector<1x8x128xf32>,
    } else {
    }
    %c0_i32_26 = arith.constant 0 : i32
    %29 = arith.cmpi eq, %arg1, %c0_i32_26 : i32
    %c0_i32_27 = arith.constant 0 : i32
    %30 = arith.cmpi eq, %arg2, %c0_i32_27 : i32
    %31 = arith.andi %29, %30 : i1
    %32 = arith.extui %31 : i1 to i32
    %c0_i32_28 = arith.constant 0 : i32
    %33 = arith.cmpi ne, %32, %c0_i32_28 : i32
    scf.if %33 {
      %c0_29 = arith.constant 0 : index
      %c0_30 = arith.constant 0 : index
      %34 = vector.load %arg9[%c0_29, %c0_30] : memref<8x256xf32, #tpu.memory_space<vmem>>, vector<8x256xf32>
      %35 = vector.shape_cast %34 : vector<8x256xf32> to vector<1x8x256xf32>
      %cst_31 = arith.constant dense<0.000000e+00> : vector<1xf32>
      %36 = vector.multi_reduction <add>, %35, %cst_31 [1, 2] : vector<1x8x256xf32> to vector<1xf32>
      %37 = vector.shape_cast %36 : vector<1xf32> to vector<1x1x1xf32>
      %38 = vector.extract %37[0, 0, 0] : f32 from vector<1x1x1xf32>
      %39 = vector.broadcast %38 : f32 to vector<1x1x128xf32>
      %c0_32 = arith.constant 0 : index
      %c0_33 = arith.constant 0 : index
      %c0_34 = arith.constant 0 : index
      %40 = vector.load %arg6[%c0_32, %c0_33, %c0_34] : memref<1x1x128xf32, #tpu.memory_space<vmem>>, vector<1x1x128xf32>
      tpu.vector_store %arg6[%c0_32, %c0_33, %c0_34], %39 {strides = array<i32>} : memref<1x1x128xf32, #tpu.memory_space<vmem>>, vector<1x1x128xf32>,
    } else {
    }
    return
  }
  func.func @transform_0(%arg0: i32, %arg1: i32, %arg2: i32) -> (i32, i32, i32) {
    %c0_i32 = arith.constant 0 : i32
    return %arg0, %arg1, %arg2 : i32, i32, i32
  }
  func.func @transform_1(%arg0: i32, %arg1: i32, %arg2: i32) -> (i32, i32, i32) {
    %c0_i32 = arith.constant 0 : i32
    return %arg0, %arg1, %arg2 : i32, i32, i32
  }
  func.func @transform_2(%arg0: i32, %arg1: i32, %arg2: i32) -> (i32, i32) {
    %c0_i32 = arith.constant 0 : i32
    %c0_i32_0 = arith.constant 0 : i32
    return %arg2, %c0_i32 : i32, i32
  }
  func.func @transform_3(%arg0: i32, %arg1: i32, %arg2: i32) -> (i32, i32, i32) {
    %c0_i32 = arith.constant 0 : i32
    %c0_i32_0 = arith.constant 0 : i32
    %c0_i32_1 = arith.constant 0 : i32
    return %arg0, %c0_i32, %c0_i32_0 : i32, i32, i32
  }
  func.func @transform_4(%arg0: i32, %arg1: i32, %arg2: i32) -> (i32, i32, i32) {
    %c0_i32 = arith.constant 0 : i32
    %c0_i32_0 = arith.constant 0 : i32
    return %arg0, %arg1, %c0_i32 : i32, i32, i32
  }
  func.func @transform_5(%arg0: i32, %arg1: i32, %arg2: i32) -> (i32, i32, i32) {
    %c0_i32 = arith.constant 0 : i32
    %c0_i32_0 = arith.constant 0 : i32
    return %arg0, %arg1, %c0_i32 : i32, i32, i32
  }
}

module attributes {stable_mosaic.version = 11 : i64} {
  func.func @_abs_diff_sum_kernel(%arg0: i32, %arg1: i32, %arg2: i32, %arg3: memref<1x32x64xf32, #tpu.memory_space<vmem>>, %arg4: memref<1x32x64xf32, #tpu.memory_space<vmem>>, %arg5: memref<1x1x128xf32, #tpu.memory_space<vmem>>, %arg6: memref<8x64xf32, #tpu.memory_space<vmem>>) attributes {dimension_semantics = [#tpu.dimension_semantics<parallel>, #tpu.dimension_semantics<arbitrary>, #tpu.dimension_semantics<arbitrary>], iteration_bounds = array<i64: 2, 1, 1>, scalar_prefetch = 0 : i64, scratch_operands = 1 : i64, tpu.core_type = #tpu.core_type<tc>, window_params = [{transform_indices = @transform_0, window_bounds = array<i64: 1, 32, 64>}, {transform_indices = @transform_1, window_bounds = array<i64: 1, 32, 64>}, {transform_indices = @transform_2, window_bounds = array<i64: 1, 1, 128>}]} {
    %c0_i32 = arith.constant 0 : i32
    %0 = arith.cmpi eq, %arg1, %c0_i32 : i32
    %c0_i32_0 = arith.constant 0 : i32
    %1 = arith.cmpi eq, %arg2, %c0_i32_0 : i32
    %2 = arith.andi %0, %1 : i1
    %c0_i32_1 = arith.constant 0 : i32
    %3 = arith.cmpi eq, %arg1, %c0_i32_1 : i32
    %c0_i32_2 = arith.constant 0 : i32
    %4 = arith.cmpi eq, %arg2, %c0_i32_2 : i32
    %5 = arith.andi %3, %4 : i1
    %6 = arith.extui %2 : i1 to i32
    %c0_i32_3 = arith.constant 0 : i32
    %7 = arith.cmpi ne, %6, %c0_i32_3 : i32
    scf.if %7 {
      %cst = arith.constant 0.000000e+00 : f32
      %26 = vector.broadcast %cst : f32 to vector<8x64xf32>
      %c0_14 = arith.constant 0 : index
      %c0_15 = arith.constant 0 : index
      %27 = vector.load %arg6[%c0_14, %c0_15] : memref<8x64xf32, #tpu.memory_space<vmem>>, vector<8x64xf32>
      tpu.vector_store %arg6[%c0_14, %c0_15], %26 {strides = array<i32>} : memref<8x64xf32, #tpu.memory_space<vmem>>, vector<8x64xf32>,
    } else {
    }
    %c0 = arith.constant 0 : index
    %c0_4 = arith.constant 0 : index
    %c0_5 = arith.constant 0 : index
    %8 = vector.load %arg3[%c0, %c0_4, %c0_5] : memref<1x32x64xf32, #tpu.memory_space<vmem>>, vector<1x32x64xf32>
    %9 = vector.shape_cast %8 : vector<1x32x64xf32> to vector<32x64xf32>
    %c0_6 = arith.constant 0 : index
    %c0_7 = arith.constant 0 : index
    %c0_8 = arith.constant 0 : index
    %10 = vector.load %arg4[%c0_6, %c0_7, %c0_8] : memref<1x32x64xf32, #tpu.memory_space<vmem>>, vector<1x32x64xf32>
    %11 = vector.shape_cast %10 : vector<1x32x64xf32> to vector<32x64xf32>
    %c0_9 = arith.constant 0 : index
    %c0_10 = arith.constant 0 : index
    %12 = vector.load %arg6[%c0_9, %c0_10] : memref<8x64xf32, #tpu.memory_space<vmem>>, vector<8x64xf32>
    %13 = arith.subf %9, %11 : vector<32x64xf32>
    %14 = math.absf %13 : vector<32x64xf32>
    %15 = vector.extract_strided_slice %14 {offsets = [0, 0], sizes = [8, 64], strides = [1, 1]} : vector<32x64xf32> to vector<8x64xf32>
    %16 = vector.extract_strided_slice %14 {offsets = [8, 0], sizes = [8, 64], strides = [1, 1]} : vector<32x64xf32> to vector<8x64xf32>
    %17 = arith.addf %15, %16 : vector<8x64xf32>
    %18 = vector.extract_strided_slice %14 {offsets = [16, 0], sizes = [8, 64], strides = [1, 1]} : vector<32x64xf32> to vector<8x64xf32>
    %19 = arith.addf %17, %18 : vector<8x64xf32>
    %20 = vector.extract_strided_slice %14 {offsets = [24, 0], sizes = [8, 64], strides = [1, 1]} : vector<32x64xf32> to vector<8x64xf32>
    %21 = arith.addf %19, %20 : vector<8x64xf32>
    %22 = arith.addf %12, %21 : vector<8x64xf32>
    %c0_11 = arith.constant 0 : index
    %c0_12 = arith.constant 0 : index
    %23 = vector.load %arg6[%c0_11, %c0_12] : memref<8x64xf32, #tpu.memory_space<vmem>>, vector<8x64xf32>
    tpu.vector_store %arg6[%c0_11, %c0_12], %22 {strides = array<i32>} : memref<8x64xf32, #tpu.memory_space<vmem>>, vector<8x64xf32>,
    %24 = arith.extui %5 : i1 to i32
    %c0_i32_13 = arith.constant 0 : i32
    %25 = arith.cmpi ne, %24, %c0_i32_13 : i32
    scf.if %25 {
      %c0_14 = arith.constant 0 : index
      %c0_15 = arith.constant 0 : index
      %26 = vector.load %arg6[%c0_14, %c0_15] : memref<8x64xf32, #tpu.memory_space<vmem>>, vector<8x64xf32>
      %27 = vector.shape_cast %26 : vector<8x64xf32> to vector<1x8x64xf32>
      %cst = arith.constant dense<0.000000e+00> : vector<1xf32>
      %28 = vector.multi_reduction <add>, %27, %cst [1, 2] : vector<1x8x64xf32> to vector<1xf32>
      %29 = vector.shape_cast %28 : vector<1xf32> to vector<1x1x1xf32>
      %30 = vector.extract %29[0, 0, 0] : f32 from vector<1x1x1xf32>
      %31 = vector.broadcast %30 : f32 to vector<1x1x128xf32>
      %c0_16 = arith.constant 0 : index
      %c0_17 = arith.constant 0 : index
      %c0_18 = arith.constant 0 : index
      %32 = vector.load %arg5[%c0_16, %c0_17, %c0_18] : memref<1x1x128xf32, #tpu.memory_space<vmem>>, vector<1x1x128xf32>
      tpu.vector_store %arg5[%c0_16, %c0_17, %c0_18], %31 {strides = array<i32>} : memref<1x1x128xf32, #tpu.memory_space<vmem>>, vector<1x1x128xf32>,
    } else {
    }
    return
  }
  func.func @transform_0(%arg0: i32, %arg1: i32, %arg2: i32) -> (i32, i32, i32) {
    %c0_i32 = arith.constant 0 : i32
    return %arg0, %arg1, %arg2 : i32, i32, i32
  }
  func.func @transform_1(%arg0: i32, %arg1: i32, %arg2: i32) -> (i32, i32, i32) {
    %c0_i32 = arith.constant 0 : i32
    return %arg0, %arg1, %arg2 : i32, i32, i32
  }
  func.func @transform_2(%arg0: i32, %arg1: i32, %arg2: i32) -> (i32, i32, i32) {
    %c0_i32 = arith.constant 0 : i32
    %c0_i32_0 = arith.constant 0 : i32
    %c0_i32_1 = arith.constant 0 : i32
    return %arg0, %c0_i32, %c0_i32_0 : i32, i32, i32
  }
}

</mosaic_0001>

<llo_original>
// kernel: _lambda_.6
$region0: #{_lambda_.6}
  #allocation0 [shape = 'u32[]', space=smem, size = 0x4, offset = 0x4, fixed_abs, tag = 'smem constant byte address 0x4 - core index']
  #allocation1 [shape = 'u32[144,128]{1,0:T(1,128)}', space=vmem, size = 0x12000, scoped, tag = 'internal scratch']
  #allocation2 [shape = 'f32[8,64]{1,0:T(8,128)}', space=vmem, size = 0x1000, scoped, tag = 'scratch operand']
  #allocation3 [shape = 'f32[8,64]{1,0:T(8,128)}', space=vmem, size = 0x1000, scoped, tag = 'scratch operand']
  %s0 = inlined_call_operand.vmem [shape: f32[2,8,64], index: 0, kind: input, shape index: {}]
  %s1 = inlined_call_operand.vmem [shape: f32[2,8,64], index: 1, kind: input, shape index: {}]
  %s2 = inlined_call_operand.vmem [shape: f32[2,1,64], index: 2, kind: input, shape index: {}]
  %s3 = inlined_call_operand.vmem [shape: f32[2,2,128], index: 3, kind: output, shape index: {}]
  %s4 = sld [smem:[#allocation0]]
  $region53: #{_lambda_.6} parent=0
    _
  %s6 = ssub.s32 1, %s4
  %s7 = scalar_select 0, %s6, %s4
  loop: start=0, step=1, limit=4
  $region2: #{_lambda_.6} parent=0 // loop_pre_header
    _
  $region3: #{_lambda_.6} parent=0 // loop_header
    %s9 = sphi 0, %s13
    %p10 = scmp.ge.s32.totalorder %s9, 4
    %s16 = sphi 0, %s35
    %s17 = sphi 0, %s31
    %s18 = sphi 0, %s27
    %s19 = sphi 0, %s16
    %s20 = sphi 0, %s17
    %s21 = sphi 0, %s18
    %s22 = sphi 0, %s19
    %s23 = sphi 0, %s20
    %s24 = sphi 0, %s21
    %s42 = sphi 0, %s44
    %s45 = sphi 0, %s42
    %s46 = sphi 0, %s45
    %s62 = sphi 0, %s46
    %s72 = sphi 0, %s74
    %s75 = sphi 0, %s72
    %s76 = sphi 0, %s75
    %s92 = sphi 0, %s76
    %s100 = sphi 0, %s102
    %s103 = sphi 0, %s100
    %s104 = sphi 0, %s103
    %s120 = sphi 0, %s104
    %s126 = sphi 0, %s128
    %s129 = sphi 0, %s126
    %s130 = sphi 0, %s129
    %s146 = sphi 0, %s130
  $region4: #{_lambda_.6} parent=0 // loop_header_branch
    %12 = sbr.rel (%p10) target = $region8
  $region5: #{_lambda_.6} parent=0 // loop_body
    %s14 = ssub.s32 %s9, 1
    %s15 = ssub.s32 %s9, 2
    %s25 = sadd.s32 1, %s18
    %p26 = scmp.ge.s32.totalorder %s25, 1
    %s27 = scalar_select %p26, 0, %s25
    %s28 = sadd.s32 1, %s17
    %s29 = scalar_select %p26, %s28, %s17
    %p30 = scmp.ge.s32.totalorder %s29, 1
    %s31 = scalar_select %p30, 0, %s29
    %s32 = sadd.s32 1, %s16
    %s33 = scalar_select %p30, %s32, %s16
    %p34 = scmp.ge.s32.totalorder %s33, 2
    %s35 = scalar_select %p34, 0, %s33
    %s36 = ssub.s32 %s16, %s35
    %s37 = ssub.s32 %s17, %s31
    %s38 = sor.u32 %s36, %s37
    %s39 = ssub.s32 %s18, %s27
    %s40 = sor.u32 %s38, %s39
    %p41 = scmp.eq.s32.totalorder %s40, 0
    %s43 = sadd.s32 %s42, 1
    %s44 = scalar_select %p41, %s42, %s43
    %p47 = pneg %p41
    %p48 = scmp.eq.s32.totalorder %s9, 1
    %p49 = por %p47, %p48
    %p50 = scmp.ne.s32.totalorder %s42, %s45
    %p51 = scmp.eq.s32.totalorder %s9, 0
    %p52 = por %p50, %p51
    %p53 = scmp.ne.s32.totalorder %s42, %s45
    %p54 = scmp.eq.s32.totalorder %s14, 1
    %p55 = por %p53, %p54
    %p56 = scmp.ne.s32.totalorder %s45, %s46
    %p57 = scmp.eq.s32.totalorder %s14, 0
    %p58 = por %p56, %p57
    %p59 = scmp.ne.s32.totalorder %s45, %s46
    %p60 = scmp.eq.s32.totalorder %s15, 1
    %p61 = por %p59, %p60
    %p63 = scmp.ne.s32.totalorder %s46, %s62
    %p64 = scmp.eq.s32.totalorder %s15, 0
    %p65 = por %p63, %p64
    %s66 = ssub.s32 %s16, %s35
    %s67 = ssub.s32 %s17, %s31
    %s68 = sor.u32 %s66, %s67
    %s69 = ssub.s32 %s18, %s27
    %s70 = sor.u32 %s68, %s69
    %p71 = scmp.eq.s32.totalorder %s70, 0
    %s73 = sadd.s32 %s72, 1
    %s74 = scalar_select %p71, %s72, %s73
    %p77 = pneg %p71
    %p78 = scmp.eq.s32.totalorder %s9, 1
    %p79 = por %p77, %p78
    %p80 = scmp.ne.s32.totalorder %s72, %s75
    %p81 = scmp.eq.s32.totalorder %s9, 0
    %p82 = por %p80, %p81
    %p83 = scmp.ne.s32.totalorder %s72, %s75
    %p84 = scmp.eq.s32.totalorder %s14, 1
    %p85 = por %p83, %p84
    %p86 = scmp.ne.s32.totalorder %s75, %s76
    %p87 = scmp.eq.s32.totalorder %s14, 0
    %p88 = por %p86, %p87
    %p89 = scmp.ne.s32.totalorder %s75, %s76
    %p90 = scmp.eq.s32.totalorder %s15, 1
    %p91 = por %p89, %p90
    %p93 = scmp.ne.s32.totalorder %s76, %s92
    %p94 = scmp.eq.s32.totalorder %s15, 0
    %p95 = por %p93, %p94
    %s96 = ssub.s32 %s16, %s35
    %s97 = ssub.s32 %s18, %s27
    %s98 = sor.u32 %s96, %s97
    %p99 = scmp.eq.s32.totalorder %s98, 0
    %s101 = sadd.s32 %s100, 1
    %s102 = scalar_select %p99, %s100, %s101
    %p105 = pneg %p99
    %p106 = scmp.eq.s32.totalorder %s9, 1
    %p107 = por %p105, %p106
    %p108 = scmp.ne.s32.totalorder %s100, %s103
    %p109 = scmp.eq.s32.totalorder %s9, 0
    %p110 = por %p108, %p109
    %p111 = scmp.ne.s32.totalorder %s100, %s103
    %p112 = scmp.eq.s32.totalorder %s14, 1
    %p113 = por %p111, %p112
    %p114 = scmp.ne.s32.totalorder %s103, %s104
    %p115 = scmp.eq.s32.totalorder %s14, 0
    %p116 = por %p114, %p115
    %p117 = scmp.ne.s32.totalorder %s103, %s104
    %p118 = scmp.eq.s32.totalorder %s15, 1
    %p119 = por %p117, %p118
    %p121 = scmp.ne.s32.totalorder %s104, %s120
    %p122 = scmp.eq.s32.totalorder %s15, 0
    %p123 = por %p121, %p122
    %s124 = ssub.s32 %s16, %s35
    %p125 = scmp.eq.s32.totalorder %s124, 0
    %s127 = sadd.s32 %s126, 1
    %s128 = scalar_select %p125, %s126, %s127
    %p131 = pneg %p125
    %p132 = scmp.eq.s32.totalorder %s9, 1
    %p133 = por %p131, %p132
    %p134 = scmp.ne.s32.totalorder %s126, %s129
    %p135 = scmp.eq.s32.totalorder %s9, 0
    %p136 = por %p134, %p135
    %p137 = scmp.ne.s32.totalorder %s126, %s129
    %p138 = scmp.eq.s32.totalorder %s14, 1
    %p139 = por %p137, %p138
    %p140 = scmp.ne.s32.totalorder %s129, %s130
    %p141 = scmp.eq.s32.totalorder %s14, 0
    %p142 = por %p140, %p141
    %p143 = scmp.ne.s32.totalorder %s129, %s130
    %p144 = scmp.eq.s32.totalorder %s15, 1
    %p145 = por %p143, %p144
    %p147 = scmp.ne.s32.totalorder %s130, %s146
    %p148 = scmp.eq.s32.totalorder %s15, 0
    %p149 = por %p147, %p148
    %p150 = scmp.le.s32.totalorder 1, %s9
    %p151 = scmp.lt.s32.totalorder %s9, 3
    %p152 = pnand %p150, %p151
    %p153 = pneg %p152
    // Predicated region
    $region9: #{_lambda_.6} parent=5 // pred_check
      _
    $region10: #{_lambda_.6} parent=5 // pred_check_branch
      %155 = sbr.rel (%p152) target = $region12
    $region11: #{_lambda_.6} parent=5 // pred_region
      %s156 = ssub.s32 %s9, 1
    $region12: #{_lambda_.6} parent=5 // pred_fallthru
      _
    %p157 = scmp.lt.s32.totalorder %s9, 2
    // Predicated region
    $region13: #{_lambda_.6} parent=5 // pred_check
      %p158 = pneg %p157
    $region14: #{_lambda_.6} parent=5 // pred_check_branch
      %160 = sbr.rel (%p158) target = $region16
    $region15: #{_lambda_.6} parent=5 // pred_region
      // Predicated region
      $region17: #{_lambda_.6} parent=15 // pred_check
        %p161 = pneg %p52
      $region18: #{_lambda_.6} parent=15 // pred_check_branch
        %163 = sbr.rel (%p161) target = $region20
      $region19: #{_lambda_.6} parent=15 // pred_region
        %p164 = scmp.lt.s32.totalorder %s16, 1
        %s165 = scalar_select %p164, %s16, 1
        %p166 = scmp.lt.s32.totalorder %s17, 0
        %s167 = scalar_select %p166, %s17, 0
        %p168 = scmp.lt.s32.totalorder %s18, 0
        %s169 = scalar_select %p168, %s18, 0
        %s170 = sadd.s32 %s169, %s167
        %s171 = sadd.s32 %s170, %s165
        %s172 = smul.addr %s171, 8
        %s173 = scalar_lea.vmem %s0, %s172
      $region20: #{_lambda_.6} parent=15 // pred_fallthru
        _
      // Predicated region
      $region21: #{_lambda_.6} parent=15 // pred_check
        %p174 = pneg %p82
      $region22: #{_lambda_.6} parent=15 // pred_check_branch
        %176 = sbr.rel (%p174) target = $region24
      $region23: #{_lambda_.6} parent=15 // pred_region
        %p177 = scmp.lt.s32.totalorder %s16, 1
        %s178 = scalar_select %p177, %s16, 1
        %p179 = scmp.lt.s32.totalorder %s17, 0
        %s180 = scalar_select %p179, %s17, 0
        %p181 = scmp.lt.s32.totalorder %s18, 0
        %s182 = scalar_select %p181, %s18, 0
        %s183 = sadd.s32 %s182, %s180
        %s184 = sadd.s32 %s183, %s178
        %s185 = smul.addr %s184, 8
        %s186 = scalar_lea.vmem %s1, %s185
      $region24: #{_lambda_.6} parent=15 // pred_fallthru
        _
      // Predicated region
      $region25: #{_lambda_.6} parent=15 // pred_check
        %p187 = pneg %p110
      $region26: #{_lambda_.6} parent=15 // pred_check_branch
        %189 = sbr.rel (%p187) target = $region28
      $region27: #{_lambda_.6} parent=15 // pred_region
        %p190 = scmp.lt.s32.totalorder %s16, 1
        %s191 = scalar_select %p190, %s16, 1
        %p192 = scmp.lt.s32.totalorder %s18, 0
        %s193 = scalar_select %p192, %s18, 0
        %s194 = sadd.s32 %s193, %s191
        %s195 = scalar_lea.vmem %s2, %s194
      $region28: #{_lambda_.6} parent=15 // pred_fallthru
        _
    $region16: #{_lambda_.6} parent=5 // pred_fallthru
      _
    %p196 = scmp.le.s32.totalorder 1, %s9
    %p197 = scmp.lt.s32.totalorder %s9, 3
    %p198 = pnand %p196, %p197
    %p199 = pneg %p198
    // Predicated region
    $region29: #{_lambda_.6} parent=5 // pred_check
      _
    $region30: #{_lambda_.6} parent=5 // pred_check_branch
      %201 = sbr.rel (%p198) target = $region32
    $region31: #{_lambda_.6} parent=5 // pred_region
      %s202 = ssub.s32 %s9, 1
      %p203 = scmp.lt.s32.totalorder %s19, 1
      %s204 = scalar_select %p203, %s19, 1
      %p205 = scmp.lt.s32.totalorder %s20, 0
      %s206 = scalar_select %p205, %s20, 0
      %p207 = scmp.lt.s32.totalorder %s21, 0
      %s208 = scalar_select %p207, %s21, 0
      %s209 = sadd.s32 %s208, %s206
      %s210 = sadd.s32 %s209, %s204
      %s211 = smul.addr %s210, 8
      %s212 = scalar_lea.vmem %s0, %s211
      %p213 = pneg %p58
      %p214 = pneg %p55
      %p215 = scmp.lt.s32.totalorder %s19, 1
      %s216 = scalar_select %p215, %s19, 1
      %p217 = scmp.lt.s32.totalorder %s20, 0
      %s218 = scalar_select %p217, %s20, 0
      %p219 = scmp.lt.s32.totalorder %s21, 0
      %s220 = scalar_select %p219, %s21, 0
      %s221 = sadd.s32 %s220, %s218
      %s222 = sadd.s32 %s221, %s216
      %s223 = smul.addr %s222, 8
      %s224 = scalar_lea.vmem %s1, %s223
      %p225 = pneg %p88
      %p226 = pneg %p85
      %p227 = scmp.lt.s32.totalorder %s19, 1
      %s228 = scalar_select %p227, %s19, 1
      %p229 = scmp.lt.s32.totalorder %s21, 0
      %s230 = scalar_select %p229, %s21, 0
      %s231 = sadd.s32 %s230, %s228
      %s232 = scalar_lea.vmem %s2, %s231
      %p233 = pneg %p116
      %p234 = pneg %p113
      %p235 = pneg %p142
      %p236 = pneg %p139
      %p237 = scmp.lt.s32.totalorder %s19, 1
      %s238 = scalar_select %p237, %s19, 1
      %s239 = smul.addr %s238, 2
      %s240 = scalar_lea.vmem %s3, %s239
      %p241 = scmp.lt.s32.totalorder %s19, 1
      %s242 = scalar_select %p241, %s19, 1
      %p243 = scmp.lt.s32.totalorder %s20, 0
      %s244 = scalar_select %p243, %s20, 0
      %p245 = scmp.lt.s32.totalorder %s21, 0
      %s246 = scalar_select %p245, %s21, 0
      %s247 = sadd.s32 %s246, %s244
      %s248 = sadd.s32 %s247, %s242
      %s249 = smul.addr %s248, 8
      %s250 = scalar_lea.vmem %s0, %s249
      %p251 = scmp.lt.s32.totalorder %s19, 1
      %s252 = scalar_select %p251, %s19, 1
      %p253 = scmp.lt.s32.totalorder %s20, 0
      %s254 = scalar_select %p253, %s20, 0
      %p255 = scmp.lt.s32.totalorder %s21, 0
      %s256 = scalar_select %p255, %s21, 0
      %s257 = sadd.s32 %s256, %s254
      %s258 = sadd.s32 %s257, %s252
      %s259 = smul.addr %s258, 8
      %s260 = scalar_lea.vmem %s1, %s259
      %p261 = scmp.lt.s32.totalorder %s19, 1
      %s262 = scalar_select %p261, %s19, 1
      %p263 = scmp.lt.s32.totalorder %s21, 0
      %s264 = scalar_select %p263, %s21, 0
      %s265 = sadd.s32 %s264, %s262
      %s266 = scalar_lea.vmem %s2, %s265
      %p267 = scmp.lt.s32.totalorder %s19, 1
      %s268 = scalar_select %p267, %s19, 1
      %s269 = smul.addr %s268, 2
      %s270 = scalar_lea.vmem %s3, %s269
      %p271 = scmp.eq.s32.totalorder %s20, 0
      %p272 = scmp.eq.s32.totalorder %s21, 0
      %p273 = pnand %p271, %p272
      %p274 = pneg %p273
      // Predicated region
      $region33: #{_lambda_.6} parent=31 // pred_check
        _
      $region34: #{_lambda_.6} parent=31 // pred_check_branch
        %276 = sbr.rel (%p273) target = $region36
      $region35: #{_lambda_.6} parent=31 // pred_region
        %vm277 = vcmask 523264
        %278 = vst.msk [vmem:[#allocation2] sm:$0xff] %vm277, 0.0
        %279 = vst.msk [vmem:[#allocation3] sm:$0xff] %vm277, 0.0
      $region36: #{_lambda_.6} parent=31 // pred_fallthru
        _
      %v280 = vld [vmem:[%s250] sm:$0xff]
      %v281 = vld [vmem:[%s260] sm:$0xff]
      %v282 = vsub.f32 %v280, %v281
      %v283 = vand.u32 2147483647, %v282
      %v284 = vld [vmem:[%s266] sm:$0x1]
      %v285 = vand.u32 2147483647, %v284
      %v286 = vld [vmem:[#allocation3] sm:$0xff]
      %v287 = vadd.f32 %v286, %v283
      %vm288 = vcmask 523264
      %289 = vst.msk [vmem:[#allocation3] sm:$0xff] %vm288, %v287
      %v290 = vld [vmem:[#allocation2] sm:$0xff]
      %v292 = vlaneseq
      %v293 = vshrl.u32 %v292, 7
      %v294 = vsub.s32 0, %v293
      %v295 = vrot.slane %v285, %v294
      %v297 = vmul.f32 %v295, %v283
      %v298 = vadd.f32 %v290, %v297
      %299 = vst.msk [vmem:[#allocation2] sm:$0xff] %vm288, %v298
      // Predicated region
      $region37: #{_lambda_.6} parent=31 // pred_check
        _
      $region38: #{_lambda_.6} parent=31 // pred_check_branch
        %301 = sbr.rel (%p273) target = $region40
      $region39: #{_lambda_.6} parent=31 // pred_region
        %v302 = vld [vmem:[#allocation2] sm:$0xff]
        %v303 = vsel %vm288, %v302, 0.0
        %304 = vadd.xlane.f32.xlu0 %v303
        %v305 = vpop.xlane.xlu0 %304
        %v306 = vrot.slane %v305, 4
        %v307 = vadd.f32 %v305, %v306
        %v308 = vrot.slane %v307, 2
        %v309 = vadd.f32 %v307, %v308
        %v310 = vrot.slane %v309, 1
        %v311 = vadd.f32 %v309, %v310
        %s312 = vtos %v311
        %v313 = vld [vmem:[#allocation3] sm:$0xff]
        %v314 = vsel %vm288, %v313, 0.0
        %315 = vadd.xlane.f32.xlu0 %v314
        %v316 = vpop.xlane.xlu0 %315
        %v317 = vrot.slane %v316, 4
        %v318 = vadd.f32 %v316, %v317
        %v319 = vrot.slane %v318, 2
        %v320 = vadd.f32 %v318, %v319
        %v321 = vrot.slane %v320, 1
        %v322 = vadd.f32 %v320, %v321
        %s323 = vtos %v322
        %v324 = vlaneseq
        %v325 = vshrl.u32 %v324, 7
        %vm326 = vcmp.eq.s32.totalorder %v325, 0
        %v327 = vstv %s312
        %v328 = vstv %s323
        %v329 = vsel %vm326, %v327, %v328
        %330 = vst [vmem:[%s270] sm:$0x3] %v329
      $region40: #{_lambda_.6} parent=31 // pred_fallthru
        _
      %p331 = scmp.lt.s32.totalorder %s19, 1
      %s332 = scalar_select %p331, %s19, 1
      %s333 = smul.addr %s332, 2
      %s334 = scalar_lea.vmem %s3, %s333
      // Predicated region
      $region41: #{_lambda_.6} parent=31 // pred_check
        %p335 = pneg %p139
      $region42: #{_lambda_.6} parent=31 // pred_check_branch
        %337 = sbr.rel (%p335) target = $region44
      $region43: #{_lambda_.6} parent=31 // pred_region
        _
      $region44: #{_lambda_.6} parent=31 // pred_fallthru
        _
    $region32: #{_lambda_.6} parent=5 // pred_fallthru
      _
    %p338 = scmp.le.s32.totalorder 2, %s9
    // Predicated region
    $region45: #{_lambda_.6} parent=5 // pred_check
      %p339 = pneg %p338
    $region46: #{_lambda_.6} parent=5 // pred_check_branch
      %341 = sbr.rel (%p339) target = $region48
    $region47: #{_lambda_.6} parent=5 // pred_region
      %s342 = ssub.s32 %s9, 2
      // Predicated region
      $region49: #{_lambda_.6} parent=47 // pred_check
        %p343 = pneg %p145
      $region50: #{_lambda_.6} parent=47 // pred_check_branch
        %345 = sbr.rel (%p343) target = $region52
      $region51: #{_lambda_.6} parent=47 // pred_region
        %p346 = scmp.lt.s32.totalorder %s22, 1
        %s347 = scalar_select %p346, %s22, 1
        %s348 = smul.addr %s347, 2
        %s349 = scalar_lea.vmem %s3, %s348
      $region52: #{_lambda_.6} parent=47 // pred_fallthru
        _
    $region48: #{_lambda_.6} parent=5 // pred_fallthru
      _
  $region6: #{_lambda_.6} parent=0 // loop_footer
    %s13 = sadd.s32 1, %s9
  $region7: #{_lambda_.6} parent=0 // loop_footer_branch
    %8 = sbr.rel target = $region3
  $region8: #{_lambda_.6} parent=0 // loop_exit
    _

// kernel: _lambda_.5
$region0: #{_lambda_.5}
  #allocation0 [shape = 'u32[]', space=smem, size = 0x4, offset = 0x4, fixed_abs, tag = 'smem constant byte address 0x4 - core index']
  #allocation1 [shape = 'u32[144,128]{1,0:T(1,128)}', space=vmem, size = 0x12000, scoped, tag = 'internal scratch']
  #allocation2 [shape = 'f32[8,256]{1,0:T(8,128)}', space=vmem, size = 0x2000, scoped, tag = 'scratch operand']
  #allocation3 [shape = 'f32[8,256]{1,0:T(8,128)}', space=vmem, size = 0x2000, scoped, tag = 'scratch operand']
  %s0 = inlined_call_operand.vmem [shape: f32[2,8,256], index: 0, kind: input, shape index: {}]
  %s1 = inlined_call_operand.vmem [shape: f32[2,8,256], index: 1, kind: input, shape index: {}]
  %s2 = inlined_call_operand.vmem [shape: f32[2,1,256], index: 2, kind: input, shape index: {}]
  %s3 = inlined_call_operand.vmem [shape: f32[2,2,128], index: 3, kind: output, shape index: {}]
  %s4 = sld [smem:[#allocation0]]
  $region53: #{_lambda_.5} parent=0
    _
  %s6 = ssub.s32 1, %s4
  %s7 = scalar_select 0, %s6, %s4
  loop: start=0, step=1, limit=4
  $region2: #{_lambda_.5} parent=0 // loop_pre_header
    _
  $region3: #{_lambda_.5} parent=0 // loop_header
    %s9 = sphi 0, %s13
    %p10 = scmp.ge.s32.totalorder %s9, 4
    %s16 = sphi 0, %s35
    %s17 = sphi 0, %s31
    %s18 = sphi 0, %s27
    %s19 = sphi 0, %s16
    %s20 = sphi 0, %s17
    %s21 = sphi 0, %s18
    %s22 = sphi 0, %s19
    %s23 = sphi 0, %s20
    %s24 = sphi 0, %s21
    %s42 = sphi 0, %s44
    %s45 = sphi 0, %s42
    %s46 = sphi 0, %s45
    %s62 = sphi 0, %s46
    %s72 = sphi 0, %s74
    %s75 = sphi 0, %s72
    %s76 = sphi 0, %s75
    %s92 = sphi 0, %s76
    %s100 = sphi 0, %s102
    %s103 = sphi 0, %s100
    %s104 = sphi 0, %s103
    %s120 = sphi 0, %s104
    %s126 = sphi 0, %s128
    %s129 = sphi 0, %s126
    %s130 = sphi 0, %s129
    %s146 = sphi 0, %s130
  $region4: #{_lambda_.5} parent=0 // loop_header_branch
    %12 = sbr.rel (%p10) target = $region8
  $region5: #{_lambda_.5} parent=0 // loop_body
    %s14 = ssub.s32 %s9, 1
    %s15 = ssub.s32 %s9, 2
    %s25 = sadd.s32 1, %s18
    %p26 = scmp.ge.s32.totalorder %s25, 1
    %s27 = scalar_select %p26, 0, %s25
    %s28 = sadd.s32 1, %s17
    %s29 = scalar_select %p26, %s28, %s17
    %p30 = scmp.ge.s32.totalorder %s29, 1
    %s31 = scalar_select %p30, 0, %s29
    %s32 = sadd.s32 1, %s16
    %s33 = scalar_select %p30, %s32, %s16
    %p34 = scmp.ge.s32.totalorder %s33, 2
    %s35 = scalar_select %p34, 0, %s33
    %s36 = ssub.s32 %s16, %s35
    %s37 = ssub.s32 %s17, %s31
    %s38 = sor.u32 %s36, %s37
    %s39 = ssub.s32 %s18, %s27
    %s40 = sor.u32 %s38, %s39
    %p41 = scmp.eq.s32.totalorder %s40, 0
    %s43 = sadd.s32 %s42, 1
    %s44 = scalar_select %p41, %s42, %s43
    %p47 = pneg %p41
    %p48 = scmp.eq.s32.totalorder %s9, 1
    %p49 = por %p47, %p48
    %p50 = scmp.ne.s32.totalorder %s42, %s45
    %p51 = scmp.eq.s32.totalorder %s9, 0
    %p52 = por %p50, %p51
    %p53 = scmp.ne.s32.totalorder %s42, %s45
    %p54 = scmp.eq.s32.totalorder %s14, 1
    %p55 = por %p53, %p54
    %p56 = scmp.ne.s32.totalorder %s45, %s46
    %p57 = scmp.eq.s32.totalorder %s14, 0
    %p58 = por %p56, %p57
    %p59 = scmp.ne.s32.totalorder %s45, %s46
    %p60 = scmp.eq.s32.totalorder %s15, 1
    %p61 = por %p59, %p60
    %p63 = scmp.ne.s32.totalorder %s46, %s62
    %p64 = scmp.eq.s32.totalorder %s15, 0
    %p65 = por %p63, %p64
    %s66 = ssub.s32 %s16, %s35
    %s67 = ssub.s32 %s17, %s31
    %s68 = sor.u32 %s66, %s67
    %s69 = ssub.s32 %s18, %s27
    %s70 = sor.u32 %s68, %s69
    %p71 = scmp.eq.s32.totalorder %s70, 0
    %s73 = sadd.s32 %s72, 1
    %s74 = scalar_select %p71, %s72, %s73
    %p77 = pneg %p71
    %p78 = scmp.eq.s32.totalorder %s9, 1
    %p79 = por %p77, %p78
    %p80 = scmp.ne.s32.totalorder %s72, %s75
    %p81 = scmp.eq.s32.totalorder %s9, 0
    %p82 = por %p80, %p81
    %p83 = scmp.ne.s32.totalorder %s72, %s75
    %p84 = scmp.eq.s32.totalorder %s14, 1
    %p85 = por %p83, %p84
    %p86 = scmp.ne.s32.totalorder %s75, %s76
    %p87 = scmp.eq.s32.totalorder %s14, 0
    %p88 = por %p86, %p87
    %p89 = scmp.ne.s32.totalorder %s75, %s76
    %p90 = scmp.eq.s32.totalorder %s15, 1
    %p91 = por %p89, %p90
    %p93 = scmp.ne.s32.totalorder %s76, %s92
    %p94 = scmp.eq.s32.totalorder %s15, 0
    %p95 = por %p93, %p94
    %s96 = ssub.s32 %s16, %s35
    %s97 = ssub.s32 %s18, %s27
    %s98 = sor.u32 %s96, %s97
    %p99 = scmp.eq.s32.totalorder %s98, 0
    %s101 = sadd.s32 %s100, 1
    %s102 = scalar_select %p99, %s100, %s101
    %p105 = pneg %p99
    %p106 = scmp.eq.s32.totalorder %s9, 1
    %p107 = por %p105, %p106
    %p108 = scmp.ne.s32.totalorder %s100, %s103
    %p109 = scmp.eq.s32.totalorder %s9, 0
    %p110 = por %p108, %p109
    %p111 = scmp.ne.s32.totalorder %s100, %s103
    %p112 = scmp.eq.s32.totalorder %s14, 1
    %p113 = por %p111, %p112
    %p114 = scmp.ne.s32.totalorder %s103, %s104
    %p115 = scmp.eq.s32.totalorder %s14, 0
    %p116 = por %p114, %p115
    %p117 = scmp.ne.s32.totalorder %s103, %s104
    %p118 = scmp.eq.s32.totalorder %s15, 1
    %p119 = por %p117, %p118
    %p121 = scmp.ne.s32.totalorder %s104, %s120
    %p122 = scmp.eq.s32.totalorder %s15, 0
    %p123 = por %p121, %p122
    %s124 = ssub.s32 %s16, %s35
    %p125 = scmp.eq.s32.totalorder %s124, 0
    %s127 = sadd.s32 %s126, 1
    %s128 = scalar_select %p125, %s126, %s127
    %p131 = pneg %p125
    %p132 = scmp.eq.s32.totalorder %s9, 1
    %p133 = por %p131, %p132
    %p134 = scmp.ne.s32.totalorder %s126, %s129
    %p135 = scmp.eq.s32.totalorder %s9, 0
    %p136 = por %p134, %p135
    %p137 = scmp.ne.s32.totalorder %s126, %s129
    %p138 = scmp.eq.s32.totalorder %s14, 1
    %p139 = por %p137, %p138
    %p140 = scmp.ne.s32.totalorder %s129, %s130
    %p141 = scmp.eq.s32.totalorder %s14, 0
    %p142 = por %p140, %p141
    %p143 = scmp.ne.s32.totalorder %s129, %s130
    %p144 = scmp.eq.s32.totalorder %s15, 1
    %p145 = por %p143, %p144
    %p147 = scmp.ne.s32.totalorder %s130, %s146
    %p148 = scmp.eq.s32.totalorder %s15, 0
    %p149 = por %p147, %p148
    %p150 = scmp.le.s32.totalorder 1, %s9
    %p151 = scmp.lt.s32.totalorder %s9, 3
    %p152 = pnand %p150, %p151
    %p153 = pneg %p152
    // Predicated region
    $region9: #{_lambda_.5} parent=5 // pred_check
      _
    $region10: #{_lambda_.5} parent=5 // pred_check_branch
      %155 = sbr.rel (%p152) target = $region12
    $region11: #{_lambda_.5} parent=5 // pred_region
      %s156 = ssub.s32 %s9, 1
    $region12: #{_lambda_.5} parent=5 // pred_fallthru
      _
    %p157 = scmp.lt.s32.totalorder %s9, 2
    // Predicated region
    $region13: #{_lambda_.5} parent=5 // pred_check
      %p158 = pneg %p157
    $region14: #{_lambda_.5} parent=5 // pred_check_branch
      %160 = sbr.rel (%p158) target = $region16
    $region15: #{_lambda_.5} parent=5 // pred_region
      // Predicated region
      $region17: #{_lambda_.5} parent=15 // pred_check
        %p161 = pneg %p52
      $region18: #{_lambda_.5} parent=15 // pred_check_branch
        %163 = sbr.rel (%p161) target = $region20
      $region19: #{_lambda_.5} parent=15 // pred_region
        %s164 = smul.u32 2, %s18
        %p165 = scmp.lt.s32.totalorder %s16, 1
        %s166 = scalar_select %p165, %s16, 1
        %p167 = scmp.lt.s32.totalorder %s17, 0
        %s168 = scalar_select %p167, %s17, 0
        %p169 = scmp.lt.s32.totalorder %s164, 1
        %s170 = scalar_select %p169, %s164, 1
        %s171 = smul.addr %s168, 2
        %s172 = sadd.s32 %s170, %s171
        %s173 = smul.addr %s166, 2
        %s174 = sadd.s32 %s172, %s173
        %s175 = smul.addr %s174, 8
        %s176 = scalar_lea.vmem %s0, %s175
        %s177 = smul.u32 2, %s18
      $region20: #{_lambda_.5} parent=15 // pred_fallthru
        _
      // Predicated region
      $region21: #{_lambda_.5} parent=15 // pred_check
        %p178 = pneg %p82
      $region22: #{_lambda_.5} parent=15 // pred_check_branch
        %180 = sbr.rel (%p178) target = $region24
      $region23: #{_lambda_.5} parent=15 // pred_region
        %s181 = smul.u32 2, %s18
        %p182 = scmp.lt.s32.totalorder %s16, 1
        %s183 = scalar_select %p182, %s16, 1
        %p184 = scmp.lt.s32.totalorder %s17, 0
        %s185 = scalar_select %p184, %s17, 0
        %p186 = scmp.lt.s32.totalorder %s181, 1
        %s187 = scalar_select %p186, %s181, 1
        %s188 = smul.addr %s185, 2
        %s189 = sadd.s32 %s187, %s188
        %s190 = smul.addr %s183, 2
        %s191 = sadd.s32 %s189, %s190
        %s192 = smul.addr %s191, 8
        %s193 = scalar_lea.vmem %s1, %s192
        %s194 = smul.u32 2, %s18
      $region24: #{_lambda_.5} parent=15 // pred_fallthru
        _
      // Predicated region
      $region25: #{_lambda_.5} parent=15 // pred_check
        %p195 = pneg %p110
      $region26: #{_lambda_.5} parent=15 // pred_check_branch
        %197 = sbr.rel (%p195) target = $region28
      $region27: #{_lambda_.5} parent=15 // pred_region
        %s198 = smul.u32 2, %s18
        %p199 = scmp.lt.s32.totalorder %s16, 1
        %s200 = scalar_select %p199, %s16, 1
        %p201 = scmp.lt.s32.totalorder %s198, 1
        %s202 = scalar_select %p201, %s198, 1
        %s203 = smul.addr %s200, 2
        %s204 = sadd.s32 %s202, %s203
        %s205 = scalar_lea.vmem %s2, %s204
        %s206 = smul.u32 2, %s18
      $region28: #{_lambda_.5} parent=15 // pred_fallthru
        _
    $region16: #{_lambda_.5} parent=5 // pred_fallthru
      _
    %p207 = scmp.le.s32.totalorder 1, %s9
    %p208 = scmp.lt.s32.totalorder %s9, 3
    %p209 = pnand %p207, %p208
    %p210 = pneg %p209
    // Predicated region
    $region29: #{_lambda_.5} parent=5 // pred_check
      _
    $region30: #{_lambda_.5} parent=5 // pred_check_branch
      %212 = sbr.rel (%p209) target = $region32
    $region31: #{_lambda_.5} parent=5 // pred_region
      %s213 = ssub.s32 %s9, 1
      %s214 = smul.u32 2, %s21
      %p215 = scmp.lt.s32.totalorder %s19, 1
      %s216 = scalar_select %p215, %s19, 1
      %p217 = scmp.lt.s32.totalorder %s20, 0
      %s218 = scalar_select %p217, %s20, 0
      %p219 = scmp.lt.s32.totalorder %s214, 1
      %s220 = scalar_select %p219, %s214, 1
      %s221 = smul.addr %s218, 2
      %s222 = sadd.s32 %s220, %s221
      %s223 = smul.addr %s216, 2
      %s224 = sadd.s32 %s222, %s223
      %s225 = smul.addr %s224, 8
      %s226 = scalar_lea.vmem %s0, %s225
      %p227 = pneg %p58
      %p228 = pneg %p55
      %s229 = smul.u32 2, %s21
      %p230 = scmp.lt.s32.totalorder %s19, 1
      %s231 = scalar_select %p230, %s19, 1
      %p232 = scmp.lt.s32.totalorder %s20, 0
      %s233 = scalar_select %p232, %s20, 0
      %p234 = scmp.lt.s32.totalorder %s229, 1
      %s235 = scalar_select %p234, %s229, 1
      %s236 = smul.addr %s233, 2
      %s237 = sadd.s32 %s235, %s236
      %s238 = smul.addr %s231, 2
      %s239 = sadd.s32 %s237, %s238
      %s240 = smul.addr %s239, 8
      %s241 = scalar_lea.vmem %s1, %s240
      %p242 = pneg %p88
      %p243 = pneg %p85
      %s244 = smul.u32 2, %s21
      %p245 = scmp.lt.s32.totalorder %s19, 1
      %s246 = scalar_select %p245, %s19, 1
      %p247 = scmp.lt.s32.totalorder %s244, 1
      %s248 = scalar_select %p247, %s244, 1
      %s249 = smul.addr %s246, 2
      %s250 = sadd.s32 %s248, %s249
      %s251 = scalar_lea.vmem %s2, %s250
      %p252 = pneg %p116
      %p253 = pneg %p113
      %p254 = pneg %p142
      %p255 = pneg %p139
      %p256 = scmp.lt.s32.totalorder %s19, 1
      %s257 = scalar_select %p256, %s19, 1
      %s258 = smul.addr %s257, 2
      %s259 = scalar_lea.vmem %s3, %s258
      %s260 = smul.u32 2, %s21
      %p261 = scmp.lt.s32.totalorder %s19, 1
      %s262 = scalar_select %p261, %s19, 1
      %p263 = scmp.lt.s32.totalorder %s20, 0
      %s264 = scalar_select %p263, %s20, 0
      %p265 = scmp.lt.s32.totalorder %s260, 1
      %s266 = scalar_select %p265, %s260, 1
      %s267 = smul.addr %s264, 2
      %s268 = sadd.s32 %s266, %s267
      %s269 = smul.addr %s262, 2
      %s270 = sadd.s32 %s268, %s269
      %s271 = smul.addr %s270, 8
      %s272 = scalar_lea.vmem %s0, %s271
      %s273 = smul.u32 2, %s21
      %s274 = smul.u32 2, %s21
      %p275 = scmp.lt.s32.totalorder %s19, 1
      %s276 = scalar_select %p275, %s19, 1
      %p277 = scmp.lt.s32.totalorder %s20, 0
      %s278 = scalar_select %p277, %s20, 0
      %p279 = scmp.lt.s32.totalorder %s274, 1
      %s280 = scalar_select %p279, %s274, 1
      %s281 = smul.addr %s278, 2
      %s282 = sadd.s32 %s280, %s281
      %s283 = smul.addr %s276, 2
      %s284 = sadd.s32 %s282, %s283
      %s285 = smul.addr %s284, 8
      %s286 = scalar_lea.vmem %s1, %s285
      %s287 = smul.u32 2, %s21
      %s288 = smul.u32 2, %s21
      %p289 = scmp.lt.s32.totalorder %s19, 1
      %s290 = scalar_select %p289, %s19, 1
      %p291 = scmp.lt.s32.totalorder %s288, 1
      %s292 = scalar_select %p291, %s288, 1
      %s293 = smul.addr %s290, 2
      %s294 = sadd.s32 %s292, %s293
      %s295 = scalar_lea.vmem %s2, %s294
      %s296 = smul.u32 2, %s21
      %p297 = scmp.lt.s32.totalorder %s19, 1
      %s298 = scalar_select %p297, %s19, 1
      %s299 = smul.addr %s298, 2
      %s300 = scalar_lea.vmem %s3, %s299
      %p301 = scmp.eq.s32.totalorder %s20, 0
      %p302 = scmp.eq.s32.totalorder %s21, 0
      %p303 = pnand %p301, %p302
      %p304 = pneg %p303
      // Predicated region
      $region33: #{_lambda_.5} parent=31 // pred_check
        _
      $region34: #{_lambda_.5} parent=31 // pred_check_branch
        %306 = sbr.rel (%p303) target = $region36
      $region35: #{_lambda_.5} parent=31 // pred_region
        %307 = vst [vmem:[#allocation2] sm:$0xff] 0.0
        %308 = vst [vmem:[#allocation2 + $0x8] sm:$0xff] 0.0
        %309 = vst [vmem:[#allocation3] sm:$0xff] 0.0
        %310 = vst [vmem:[#allocation3 + $0x8] sm:$0xff] 0.0
      $region36: #{_lambda_.5} parent=31 // pred_fallthru
        _
      %v311 = vld [vmem:[%s272] sm:$0xff]
      %v312 = vld [vmem:[%s272 + $0x8] sm:$0xff]
      %v313 = vld [vmem:[%s286] sm:$0xff]
      %v314 = vld [vmem:[%s286 + $0x8] sm:$0xff]
      %v315 = vsub.f32 %v311, %v313
      %v316 = vsub.f32 %v312, %v314
      %v317 = vand.u32 2147483647, %v315
      %v318 = vand.u32 2147483647, %v316
      %v319 = vld [vmem:[%s295] sm:$0x3]
      %v320 = vand.u32 2147483647, %v319
      %v321 = vld [vmem:[#allocation3] sm:$0xff]
      %v322 = vld [vmem:[#allocation3 + $0x8] sm:$0xff]
      %v323 = vadd.f32 %v321, %v317
      %v324 = vadd.f32 %v322, %v318
      %325 = vst [vmem:[#allocation3] sm:$0xff] %v323
      %326 = vst [vmem:[#allocation3 + $0x8] sm:$0xff] %v324
      %v327 = vld [vmem:[#allocation2] sm:$0xff]
      %v328 = vld [vmem:[#allocation2 + $0x8] sm:$0xff]
      %v330 = vlaneseq
      %v331 = vshrl.u32 %v330, 7
      %v332 = vsub.s32 0, %v331
      %v333 = vrot.slane %v320, %v332
      %v334 = vlaneseq
      %v335 = vshrl.u32 %v334, 7
      %v336 = vsub.s32 1, %v335
      %v337 = vrot.slane %v320, %v336
      %v340 = vmul.f32 %v333, %v317
      %v341 = vmul.f32 %v337, %v318
      %v342 = vadd.f32 %v327, %v340
      %v343 = vadd.f32 %v328, %v341
      %344 = vst [vmem:[#allocation2] sm:$0xff] %v342
      %345 = vst [vmem:[#allocation2 + $0x8] sm:$0xff] %v343
      // Predicated region
      $region37: #{_lambda_.5} parent=31 // pred_check
        _
      $region38: #{_lambda_.5} parent=31 // pred_check_branch
        %347 = sbr.rel (%p303) target = $region40
      $region39: #{_lambda_.5} parent=31 // pred_region
        %v348 = vld [vmem:[#allocation2] sm:$0xff]
        %v349 = vld [vmem:[#allocation2 + $0x8] sm:$0xff]
        %v350 = vadd.f32 %v348, %v349
        %351 = vadd.xlane.f32.xlu0 %v350
        %v352 = vpop.xlane.xlu0 %351
        %v353 = vrot.slane %v352, 4
        %v354 = vadd.f32 %v352, %v353
        %v355 = vrot.slane %v354, 2
        %v356 = vadd.f32 %v354, %v355
        %v357 = vrot.slane %v356, 1
        %v358 = vadd.f32 %v356, %v357
        %s359 = vtos %v358
        %v360 = vld [vmem:[#allocation3] sm:$0xff]
        %v361 = vld [vmem:[#allocation3 + $0x8] sm:$0xff]
        %v362 = vadd.f32 %v360, %v361
        %363 = vadd.xlane.f32.xlu0 %v362
        %v364 = vpop.xlane.xlu0 %363
        %v365 = vrot.slane %v364, 4
        %v366 = vadd.f32 %v364, %v365
        %v367 = vrot.slane %v366, 2
        %v368 = vadd.f32 %v366, %v367
        %v369 = vrot.slane %v368, 1
        %v370 = vadd.f32 %v368, %v369
        %s371 = vtos %v370
        %v372 = vlaneseq
        %v373 = vshrl.u32 %v372, 7
        %vm374 = vcmp.eq.s32.totalorder %v373, 0
        %v375 = vstv %s359
        %v376 = vstv %s371
        %v377 = vsel %vm374, %v375, %v376
        %378 = vst [vmem:[%s300] sm:$0x3] %v377
      $region40: #{_lambda_.5} parent=31 // pred_fallthru
        _
      %p379 = scmp.lt.s32.totalorder %s19, 1
      %s380 = scalar_select %p379, %s19, 1
      %s381 = smul.addr %s380, 2
      %s382 = scalar_lea.vmem %s3, %s381
      // Predicated region
      $region41: #{_lambda_.5} parent=31 // pred_check
        %p383 = pneg %p139
      $region42: #{_lambda_.5} parent=31 // pred_check_branch
        %385 = sbr.rel (%p383) target = $region44
      $region43: #{_lambda_.5} parent=31 // pred_region
        _
      $region44: #{_lambda_.5} parent=31 // pred_fallthru
        _
    $region32: #{_lambda_.5} parent=5 // pred_fallthru
      _
    %p386 = scmp.le.s32.totalorder 2, %s9
    // Predicated region
    $region45: #{_lambda_.5} parent=5 // pred_check
      %p387 = pneg %p386
    $region46: #{_lambda_.5} parent=5 // pred_check_branch
      %389 = sbr.rel (%p387) target = $region48
    $region47: #{_lambda_.5} parent=5 // pred_region
      %s390 = ssub.s32 %s9, 2
      // Predicated region
      $region49: #{_lambda_.5} parent=47 // pred_check
        %p391 = pneg %p145
      $region50: #{_lambda_.5} parent=47 // pred_check_branch
        %393 = sbr.rel (%p391) target = $region52
      $region51: #{_lambda_.5} parent=47 // pred_region
        %p394 = scmp.lt.s32.totalorder %s22, 1
        %s395 = scalar_select %p394, %s22, 1
        %s396 = smul.addr %s395, 2
        %s397 = scalar_lea.vmem %s3, %s396
      $region52: #{_lambda_.5} parent=47 // pred_fallthru
        _
    $region48: #{_lambda_.5} parent=5 // pred_fallthru
      _
  $region6: #{_lambda_.5} parent=0 // loop_footer
    %s13 = sadd.s32 1, %s9
  $region7: #{_lambda_.5} parent=0 // loop_footer_branch
    %8 = sbr.rel target = $region3
  $region8: #{_lambda_.5} parent=0 // loop_exit
    _

// kernel: _lambda_.7
$region0: #{_lambda_.7}
  #allocation0 [shape = 'u32[]', space=smem, size = 0x4, offset = 0x4, fixed_abs, tag = 'smem constant byte address 0x4 - core index']
  #allocation1 [shape = 'u32[144,128]{1,0:T(1,128)}', space=vmem, size = 0x12000, scoped, tag = 'internal scratch']
  #allocation2 [shape = 'f32[8,64]{1,0:T(8,128)}', space=vmem, size = 0x1000, scoped, tag = 'scratch operand']
  %s0 = inlined_call_operand.vmem [shape: f32[2,16,64], index: 0, kind: input, shape index: {}]
  %s1 = inlined_call_operand.vmem [shape: f32[2,16,64], index: 1, kind: input, shape index: {}]
  %s2 = inlined_call_operand.vmem [shape: f32[2,1,128], index: 2, kind: output, shape index: {}]
  %s3 = sld [smem:[#allocation0]]
  $region49: #{_lambda_.7} parent=0
    _
  %s5 = ssub.s32 1, %s3
  %s6 = scalar_select 0, %s5, %s3
  loop: start=0, step=1, limit=4
  $region2: #{_lambda_.7} parent=0 // loop_pre_header
    _
  $region3: #{_lambda_.7} parent=0 // loop_header
    %s8 = sphi 0, %s12
    %p9 = scmp.ge.s32.totalorder %s8, 4
    %s15 = sphi 0, %s34
    %s16 = sphi 0, %s30
    %s17 = sphi 0, %s26
    %s18 = sphi 0, %s15
    %s19 = sphi 0, %s16
    %s20 = sphi 0, %s17
    %s21 = sphi 0, %s18
    %s22 = sphi 0, %s19
    %s23 = sphi 0, %s20
    %s41 = sphi 0, %s43
    %s44 = sphi 0, %s41
    %s45 = sphi 0, %s44
    %s61 = sphi 0, %s45
    %s71 = sphi 0, %s73
    %s74 = sphi 0, %s71
    %s75 = sphi 0, %s74
    %s91 = sphi 0, %s75
    %s97 = sphi 0, %s99
    %s100 = sphi 0, %s97
    %s101 = sphi 0, %s100
    %s117 = sphi 0, %s101
  $region4: #{_lambda_.7} parent=0 // loop_header_branch
    %11 = sbr.rel (%p9) target = $region8
  $region5: #{_lambda_.7} parent=0 // loop_body
    %s13 = ssub.s32 %s8, 1
    %s14 = ssub.s32 %s8, 2
    %s24 = sadd.s32 1, %s17
    %p25 = scmp.ge.s32.totalorder %s24, 1
    %s26 = scalar_select %p25, 0, %s24
    %s27 = sadd.s32 1, %s16
    %s28 = scalar_select %p25, %s27, %s16
    %p29 = scmp.ge.s32.totalorder %s28, 1
    %s30 = scalar_select %p29, 0, %s28
    %s31 = sadd.s32 1, %s15
    %s32 = scalar_select %p29, %s31, %s15
    %p33 = scmp.ge.s32.totalorder %s32, 2
    %s34 = scalar_select %p33, 0, %s32
    %s35 = ssub.s32 %s15, %s34
    %s36 = ssub.s32 %s16, %s30
    %s37 = sor.u32 %s35, %s36
    %s38 = ssub.s32 %s17, %s26
    %s39 = sor.u32 %s37, %s38
    %p40 = scmp.eq.s32.totalorder %s39, 0
    %s42 = sadd.s32 %s41, 1
    %s43 = scalar_select %p40, %s41, %s42
    %p46 = pneg %p40
    %p47 = scmp.eq.s32.totalorder %s8, 1
    %p48 = por %p46, %p47
    %p49 = scmp.ne.s32.totalorder %s41, %s44
    %p50 = scmp.eq.s32.totalorder %s8, 0
    %p51 = por %p49, %p50
    %p52 = scmp.ne.s32.totalorder %s41, %s44
    %p53 = scmp.eq.s32.totalorder %s13, 1
    %p54 = por %p52, %p53
    %p55 = scmp.ne.s32.totalorder %s44, %s45
    %p56 = scmp.eq.s32.totalorder %s13, 0
    %p57 = por %p55, %p56
    %p58 = scmp.ne.s32.totalorder %s44, %s45
    %p59 = scmp.eq.s32.totalorder %s14, 1
    %p60 = por %p58, %p59
    %p62 = scmp.ne.s32.totalorder %s45, %s61
    %p63 = scmp.eq.s32.totalorder %s14, 0
    %p64 = por %p62, %p63
    %s65 = ssub.s32 %s15, %s34
    %s66 = ssub.s32 %s16, %s30
    %s67 = sor.u32 %s65, %s66
    %s68 = ssub.s32 %s17, %s26
    %s69 = sor.u32 %s67, %s68
    %p70 = scmp.eq.s32.totalorder %s69, 0
    %s72 = sadd.s32 %s71, 1
    %s73 = scalar_select %p70, %s71, %s72
    %p76 = pneg %p70
    %p77 = scmp.eq.s32.totalorder %s8, 1
    %p78 = por %p76, %p77
    %p79 = scmp.ne.s32.totalorder %s71, %s74
    %p80 = scmp.eq.s32.totalorder %s8, 0
    %p81 = por %p79, %p80
    %p82 = scmp.ne.s32.totalorder %s71, %s74
    %p83 = scmp.eq.s32.totalorder %s13, 1
    %p84 = por %p82, %p83
    %p85 = scmp.ne.s32.totalorder %s74, %s75
    %p86 = scmp.eq.s32.totalorder %s13, 0
    %p87 = por %p85, %p86
    %p88 = scmp.ne.s32.totalorder %s74, %s75
    %p89 = scmp.eq.s32.totalorder %s14, 1
    %p90 = por %p88, %p89
    %p92 = scmp.ne.s32.totalorder %s75, %s91
    %p93 = scmp.eq.s32.totalorder %s14, 0
    %p94 = por %p92, %p93
    %s95 = ssub.s32 %s15, %s34
    %p96 = scmp.eq.s32.totalorder %s95, 0
    %s98 = sadd.s32 %s97, 1
    %s99 = scalar_select %p96, %s97, %s98
    %p102 = pneg %p96
    %p103 = scmp.eq.s32.totalorder %s8, 1
    %p104 = por %p102, %p103
    %p105 = scmp.ne.s32.totalorder %s97, %s100
    %p106 = scmp.eq.s32.totalorder %s8, 0
    %p107 = por %p105, %p106
    %p108 = scmp.ne.s32.totalorder %s97, %s100
    %p109 = scmp.eq.s32.totalorder %s13, 1
    %p110 = por %p108, %p109
    %p111 = scmp.ne.s32.totalorder %s100, %s101
    %p112 = scmp.eq.s32.totalorder %s13, 0
    %p113 = por %p111, %p112
    %p114 = scmp.ne.s32.totalorder %s100, %s101
    %p115 = scmp.eq.s32.totalorder %s14, 1
    %p116 = por %p114, %p115
    %p118 = scmp.ne.s32.totalorder %s101, %s117
    %p119 = scmp.eq.s32.totalorder %s14, 0
    %p120 = por %p118, %p119
    %p121 = scmp.le.s32.totalorder 1, %s8
    %p122 = scmp.lt.s32.totalorder %s8, 3
    %p123 = pnand %p121, %p122
    %p124 = pneg %p123
    // Predicated region
    $region9: #{_lambda_.7} parent=5 // pred_check
      _
    $region10: #{_lambda_.7} parent=5 // pred_check_branch
      %126 = sbr.rel (%p123) target = $region12
    $region11: #{_lambda_.7} parent=5 // pred_region
      %s127 = ssub.s32 %s8, 1
    $region12: #{_lambda_.7} parent=5 // pred_fallthru
      _
    %p128 = scmp.lt.s32.totalorder %s8, 2
    // Predicated region
    $region13: #{_lambda_.7} parent=5 // pred_check
      %p129 = pneg %p128
    $region14: #{_lambda_.7} parent=5 // pred_check_branch
      %131 = sbr.rel (%p129) target = $region16
    $region15: #{_lambda_.7} parent=5 // pred_region
      // Predicated region
      $region17: #{_lambda_.7} parent=15 // pred_check
        %p132 = pneg %p51
      $region18: #{_lambda_.7} parent=15 // pred_check_branch
        %134 = sbr.rel (%p132) target = $region20
      $region19: #{_lambda_.7} parent=15 // pred_region
        %s135 = smul.u32 2, %s16
        %p136 = scmp.lt.s32.totalorder %s15, 1
        %s137 = scalar_select %p136, %s15, 1
        %p138 = scmp.lt.s32.totalorder %s135, 1
        %s139 = scalar_select %p138, %s135, 1
        %p140 = scmp.lt.s32.totalorder %s17, 0
        %s141 = scalar_select %p140, %s17, 0
        %s142 = sadd.s32 %s141, %s139
        %s143 = smul.addr %s137, 2
        %s144 = sadd.s32 %s142, %s143
        %s145 = smul.addr %s144, 8
        %s146 = scalar_lea.vmem %s0, %s145
        %s147 = smul.u32 2, %s16
      $region20: #{_lambda_.7} parent=15 // pred_fallthru
        _
      // Predicated region
      $region21: #{_lambda_.7} parent=15 // pred_check
        %p148 = pneg %p81
      $region22: #{_lambda_.7} parent=15 // pred_check_branch
        %150 = sbr.rel (%p148) target = $region24
      $region23: #{_lambda_.7} parent=15 // pred_region
        %s151 = smul.u32 2, %s16
        %p152 = scmp.lt.s32.totalorder %s15, 1
        %s153 = scalar_select %p152, %s15, 1
        %p154 = scmp.lt.s32.totalorder %s151, 1
        %s155 = scalar_select %p154, %s151, 1
        %p156 = scmp.lt.s32.totalorder %s17, 0
        %s157 = scalar_select %p156, %s17, 0
        %s158 = sadd.s32 %s157, %s155
        %s159 = smul.addr %s153, 2
        %s160 = sadd.s32 %s158, %s159
        %s161 = smul.addr %s160, 8
        %s162 = scalar_lea.vmem %s1, %s161
        %s163 = smul.u32 2, %s16
      $region24: #{_lambda_.7} parent=15 // pred_fallthru
        _
    $region16: #{_lambda_.7} parent=5 // pred_fallthru
      _
    %p164 = scmp.le.s32.totalorder 1, %s8
    %p165 = scmp.lt.s32.totalorder %s8, 3
    %p166 = pnand %p164, %p165
    %p167 = pneg %p166
    // Predicated region
    $region25: #{_lambda_.7} parent=5 // pred_check
      _
    $region26: #{_lambda_.7} parent=5 // pred_check_branch
      %169 = sbr.rel (%p166) target = $region28
    $region27: #{_lambda_.7} parent=5 // pred_region
      %s170 = ssub.s32 %s8, 1
      %s171 = smul.u32 2, %s19
      %p172 = scmp.lt.s32.totalorder %s18, 1
      %s173 = scalar_select %p172, %s18, 1
      %p174 = scmp.lt.s32.totalorder %s171, 1
      %s175 = scalar_select %p174, %s171, 1
      %p176 = scmp.lt.s32.totalorder %s20, 0
      %s177 = scalar_select %p176, %s20, 0
      %s178 = sadd.s32 %s177, %s175
      %s179 = smul.addr %s173, 2
      %s180 = sadd.s32 %s178, %s179
      %s181 = smul.addr %s180, 8
      %s182 = scalar_lea.vmem %s0, %s181
      %p183 = pneg %p57
      %p184 = pneg %p54
      %s185 = smul.u32 2, %s19
      %p186 = scmp.lt.s32.totalorder %s18, 1
      %s187 = scalar_select %p186, %s18, 1
      %p188 = scmp.lt.s32.totalorder %s185, 1
      %s189 = scalar_select %p188, %s185, 1
      %p190 = scmp.lt.s32.totalorder %s20, 0
      %s191 = scalar_select %p190, %s20, 0
      %s192 = sadd.s32 %s191, %s189
      %s193 = smul.addr %s187, 2
      %s194 = sadd.s32 %s192, %s193
      %s195 = smul.addr %s194, 8
      %s196 = scalar_lea.vmem %s1, %s195
      %p197 = pneg %p87
      %p198 = pneg %p84
      %p199 = pneg %p113
      %p200 = pneg %p110
      %p201 = scmp.lt.s32.totalorder %s18, 1
      %s202 = scalar_select %p201, %s18, 1
      %s203 = scalar_lea.vmem %s2, %s202
      %s204 = smul.u32 2, %s19
      %p205 = scmp.lt.s32.totalorder %s18, 1
      %s206 = scalar_select %p205, %s18, 1
      %p207 = scmp.lt.s32.totalorder %s204, 1
      %s208 = scalar_select %p207, %s204, 1
      %p209 = scmp.lt.s32.totalorder %s20, 0
      %s210 = scalar_select %p209, %s20, 0
      %s211 = sadd.s32 %s210, %s208
      %s212 = smul.addr %s206, 2
      %s213 = sadd.s32 %s211, %s212
      %s214 = smul.addr %s213, 8
      %s215 = scalar_lea.vmem %s0, %s214
      %s216 = smul.u32 2, %s19
      %s217 = smul.u32 2, %s19
      %p218 = scmp.lt.s32.totalorder %s18, 1
      %s219 = scalar_select %p218, %s18, 1
      %p220 = scmp.lt.s32.totalorder %s217, 1
      %s221 = scalar_select %p220, %s217, 1
      %p222 = scmp.lt.s32.totalorder %s20, 0
      %s223 = scalar_select %p222, %s20, 0
      %s224 = sadd.s32 %s223, %s221
      %s225 = smul.addr %s219, 2
      %s226 = sadd.s32 %s224, %s225
      %s227 = smul.addr %s226, 8
      %s228 = scalar_lea.vmem %s1, %s227
      %s229 = smul.u32 2, %s19
      %p230 = scmp.lt.s32.totalorder %s18, 1
      %s231 = scalar_select %p230, %s18, 1
      %s232 = scalar_lea.vmem %s2, %s231
      %p233 = scmp.eq.s32.totalorder %s19, 0
      %p234 = scmp.eq.s32.totalorder %s20, 0
      %p235 = pnand %p233, %p234
      %p236 = pneg %p235
      // Predicated region
      $region29: #{_lambda_.7} parent=27 // pred_check
        _
      $region30: #{_lambda_.7} parent=27 // pred_check_branch
        %238 = sbr.rel (%p235) target = $region32
      $region31: #{_lambda_.7} parent=27 // pred_region
        %vm239 = vcmask 523264
        %240 = vst.msk [vmem:[#allocation2] sm:$0xff] %vm239, 0.0
      $region32: #{_lambda_.7} parent=27 // pred_fallthru
        _
      %v241 = vld [vmem:[%s215] sm:$0xff]
      %v242 = vld [vmem:[%s215 + $0x8] sm:$0xff]
      %v243 = vld [vmem:[%s228] sm:$0xff]
      %v244 = vld [vmem:[%s228 + $0x8] sm:$0xff]
      %v245 = vld [vmem:[#allocation2] sm:$0xff]
      %v246 = vsub.f32 %v241, %v243
      %v247 = vsub.f32 %v242, %v244
      %v248 = vand.u32 2147483647, %v246
      %v249 = vand.u32 2147483647, %v247
      %v250 = vadd.f32 %v248, %v249
      %v251 = vadd.f32 %v245, %v250
      %vm252 = vcmask 523264
      %253 = vst.msk [vmem:[#allocation2] sm:$0xff] %vm252, %v251
      // Predicated region
      $region33: #{_lambda_.7} parent=27 // pred_check
        _
      $region34: #{_lambda_.7} parent=27 // pred_check_branch
        %255 = sbr.rel (%p235) target = $region36
      $region35: #{_lambda_.7} parent=27 // pred_region
        %v256 = vld [vmem:[#allocation2] sm:$0xff]
        %v257 = vsel %vm252, %v256, 0.0
        %258 = vadd.xlane.f32.xlu0 %v257
        %v259 = vpop.xlane.xlu0 %258
        %v260 = vrot.slane %v259, 4
        %v261 = vadd.f32 %v259, %v260
        %v262 = vrot.slane %v261, 2
        %v263 = vadd.f32 %v261, %v262
        %v264 = vrot.slane %v263, 1
        %v265 = vadd.f32 %v263, %v264
        %s266 = vtos %v265
        %v267 = vstv %s266
        %268 = vst [vmem:[%s232] sm:$0x1] %v267
      $region36: #{_lambda_.7} parent=27 // pred_fallthru
        _
      %p269 = scmp.lt.s32.totalorder %s18, 1
      %s270 = scalar_select %p269, %s18, 1
      %s271 = scalar_lea.vmem %s2, %s270
      // Predicated region
      $region37: #{_lambda_.7} parent=27 // pred_check
        %p272 = pneg %p110
      $region38: #{_lambda_.7} parent=27 // pred_check_branch
        %274 = sbr.rel (%p272) target = $region40
      $region39: #{_lambda_.7} parent=27 // pred_region
        _
      $region40: #{_lambda_.7} parent=27 // pred_fallthru
        _
    $region28: #{_lambda_.7} parent=5 // pred_fallthru
      _
    %p275 = scmp.le.s32.totalorder 2, %s8
    // Predicated region
    $region41: #{_lambda_.7} parent=5 // pred_check
      %p276 = pneg %p275
    $region42: #{_lambda_.7} parent=5 // pred_check_branch
      %278 = sbr.rel (%p276) target = $region44
    $region43: #{_lambda_.7} parent=5 // pred_region
      %s279 = ssub.s32 %s8, 2
      // Predicated region
      $region45: #{_lambda_.7} parent=43 // pred_check
        %p280 = pneg %p116
      $region46: #{_lambda_.7} parent=43 // pred_check_branch
        %282 = sbr.rel (%p280) target = $region48
      $region47: #{_lambda_.7} parent=43 // pred_region
        %p283 = scmp.lt.s32.totalorder %s21, 1
        %s284 = scalar_select %p283, %s21, 1
        %s285 = scalar_lea.vmem %s2, %s284
      $region48: #{_lambda_.7} parent=43 // pred_fallthru
        _
    $region44: #{_lambda_.7} parent=5 // pred_fallthru
      _
  $region6: #{_lambda_.7} parent=0 // loop_footer
    %s12 = sadd.s32 1, %s8
  $region7: #{_lambda_.7} parent=0 // loop_footer_branch
    %7 = sbr.rel target = $region3
  $region8: #{_lambda_.7} parent=0 // loop_exit
    _

// kernel: _lambda_.8
$region0: #{_lambda_.8}
  #allocation0 [shape = 'u32[]', space=smem, size = 0x4, offset = 0x4, fixed_abs, tag = 'smem constant byte address 0x4 - core index']
  #allocation1 [shape = 'u32[144,128]{1,0:T(1,128)}', space=vmem, size = 0x12000, scoped, tag = 'internal scratch']
  #allocation2 [shape = 'f32[8,256]{1,0:T(8,128)}', space=vmem, size = 0x2000, scoped, tag = 'scratch operand']
  #allocation3 [shape = 'f32[8,128]{1,0:T(8,128)}', space=vmem, size = 0x1000, scoped, tag = 'scratch operand']
  #allocation4 [shape = 'f32[8,128]{1,0:T(8,128)}', space=vmem, size = 0x1000, scoped, tag = 'scratch operand']
  %s0 = inlined_call_operand.vmem [shape: f32[2,8,256], index: 0, kind: input, shape index: {}]
  %s1 = inlined_call_operand.vmem [shape: f32[2,8,256], index: 1, kind: input, shape index: {}]
  %s2 = inlined_call_operand.vmem [shape: f32[256,128], index: 2, kind: input, shape index: {}]
  %s3 = inlined_call_operand.vmem [shape: f32[2,1,128], index: 3, kind: output, shape index: {0}]
  %s4 = inlined_call_operand.vmem [shape: f32[2,8,128], index: 4, kind: output, shape index: {1}]
  %s5 = inlined_call_operand.vmem [shape: f32[2,8,128], index: 5, kind: output, shape index: {2}]
  %6 = xla_tuple %s3, %s4, %s5
  %s7 = sld [smem:[#allocation0]]
  $region77: #{_lambda_.8} parent=0
    _
  %s9 = ssub.s32 1, %s7
  %s10 = scalar_select 0, %s9, %s7
  loop: start=0, step=1, limit=4
  $region2: #{_lambda_.8} parent=0 // loop_pre_header
    _
  $region3: #{_lambda_.8} parent=0 // loop_header
    %s12 = sphi 0, %s16
    %p13 = scmp.ge.s32.totalorder %s12, 4
    %s19 = sphi 0, %s38
    %s20 = sphi 0, %s34
    %s21 = sphi 0, %s30
    %s22 = sphi 0, %s19
    %s23 = sphi 0, %s20
    %s24 = sphi 0, %s21
    %s25 = sphi 0, %s22
    %s26 = sphi 0, %s23
    %s27 = sphi 0, %s24
    %s45 = sphi 0, %s47
    %s48 = sphi 0, %s45
    %s49 = sphi 0, %s48
    %s65 = sphi 0, %s49
    %s75 = sphi 0, %s77
    %s78 = sphi 0, %s75
    %s79 = sphi 0, %s78
    %s95 = sphi 0, %s79
    %s101 = sphi 0, %s103
    %s104 = sphi 0, %s101
    %s105 = sphi 0, %s104
    %s121 = sphi 0, %s105
    %s127 = sphi 0, %s129
    %s130 = sphi 0, %s127
    %s131 = sphi 0, %s130
    %s147 = sphi 0, %s131
    %s155 = sphi 0, %s157
    %s158 = sphi 0, %s155
    %s159 = sphi 0, %s158
    %s175 = sphi 0, %s159
    %s183 = sphi 0, %s185
    %s186 = sphi 0, %s183
    %s187 = sphi 0, %s186
    %s203 = sphi 0, %s187
  $region4: #{_lambda_.8} parent=0 // loop_header_branch
    %15 = sbr.rel (%p13) target = $region8
  $region5: #{_lambda_.8} parent=0 // loop_body
    %s17 = ssub.s32 %s12, 1
    %s18 = ssub.s32 %s12, 2
    %s28 = sadd.s32 1, %s21
    %p29 = scmp.ge.s32.totalorder %s28, 1
    %s30 = scalar_select %p29, 0, %s28
    %s31 = sadd.s32 1, %s20
    %s32 = scalar_select %p29, %s31, %s20
    %p33 = scmp.ge.s32.totalorder %s32, 1
    %s34 = scalar_select %p33, 0, %s32
    %s35 = sadd.s32 1, %s19
    %s36 = scalar_select %p33, %s35, %s19
    %p37 = scmp.ge.s32.totalorder %s36, 2
    %s38 = scalar_select %p37, 0, %s36
    %s39 = ssub.s32 %s19, %s38
    %s40 = ssub.s32 %s20, %s34
    %s41 = sor.u32 %s39, %s40
    %s42 = ssub.s32 %s21, %s30
    %s43 = sor.u32 %s41, %s42
    %p44 = scmp.eq.s32.totalorder %s43, 0
    %s46 = sadd.s32 %s45, 1
    %s47 = scalar_select %p44, %s45, %s46
    %p50 = pneg %p44
    %p51 = scmp.eq.s32.totalorder %s12, 1
    %p52 = por %p50, %p51
    %p53 = scmp.ne.s32.totalorder %s45, %s48
    %p54 = scmp.eq.s32.totalorder %s12, 0
    %p55 = por %p53, %p54
    %p56 = scmp.ne.s32.totalorder %s45, %s48
    %p57 = scmp.eq.s32.totalorder %s17, 1
    %p58 = por %p56, %p57
    %p59 = scmp.ne.s32.totalorder %s48, %s49
    %p60 = scmp.eq.s32.totalorder %s17, 0
    %p61 = por %p59, %p60
    %p62 = scmp.ne.s32.totalorder %s48, %s49
    %p63 = scmp.eq.s32.totalorder %s18, 1
    %p64 = por %p62, %p63
    %p66 = scmp.ne.s32.totalorder %s49, %s65
    %p67 = scmp.eq.s32.totalorder %s18, 0
    %p68 = por %p66, %p67
    %s69 = ssub.s32 %s19, %s38
    %s70 = ssub.s32 %s20, %s34
    %s71 = sor.u32 %s69, %s70
    %s72 = ssub.s32 %s21, %s30
    %s73 = sor.u32 %s71, %s72
    %p74 = scmp.eq.s32.totalorder %s73, 0
    %s76 = sadd.s32 %s75, 1
    %s77 = scalar_select %p74, %s75, %s76
    %p80 = pneg %p74
    %p81 = scmp.eq.s32.totalorder %s12, 1
    %p82 = por %p80, %p81
    %p83 = scmp.ne.s32.totalorder %s75, %s78
    %p84 = scmp.eq.s32.totalorder %s12, 0
    %p85 = por %p83, %p84
    %p86 = scmp.ne.s32.totalorder %s75, %s78
    %p87 = scmp.eq.s32.totalorder %s17, 1
    %p88 = por %p86, %p87
    %p89 = scmp.ne.s32.totalorder %s78, %s79
    %p90 = scmp.eq.s32.totalorder %s17, 0
    %p91 = por %p89, %p90
    %p92 = scmp.ne.s32.totalorder %s78, %s79
    %p93 = scmp.eq.s32.totalorder %s18, 1
    %p94 = por %p92, %p93
    %p96 = scmp.ne.s32.totalorder %s79, %s95
    %p97 = scmp.eq.s32.totalorder %s18, 0
    %p98 = por %p96, %p97
    %s99 = ssub.s32 %s21, %s30
    %p100 = scmp.eq.s32.totalorder %s99, 0
    %s102 = sadd.s32 %s101, 1
    %s103 = scalar_select %p100, %s101, %s102
    %p106 = pneg %p100
    %p107 = scmp.eq.s32.totalorder %s12, 1
    %p108 = por %p106, %p107
    %p109 = scmp.ne.s32.totalorder %s101, %s104
    %p110 = scmp.eq.s32.totalorder %s12, 0
    %p111 = por %p109, %p110
    %p112 = scmp.ne.s32.totalorder %s101, %s104
    %p113 = scmp.eq.s32.totalorder %s17, 1
    %p114 = por %p112, %p113
    %p115 = scmp.ne.s32.totalorder %s104, %s105
    %p116 = scmp.eq.s32.totalorder %s17, 0
    %p117 = por %p115, %p116
    %p118 = scmp.ne.s32.totalorder %s104, %s105
    %p119 = scmp.eq.s32.totalorder %s18, 1
    %p120 = por %p118, %p119
    %p122 = scmp.ne.s32.totalorder %s105, %s121
    %p123 = scmp.eq.s32.totalorder %s18, 0
    %p124 = por %p122, %p123
    %s125 = ssub.s32 %s19, %s38
    %p126 = scmp.eq.s32.totalorder %s125, 0
    %s128 = sadd.s32 %s127, 1
    %s129 = scalar_select %p126, %s127, %s128
    %p132 = pneg %p126
    %p133 = scmp.eq.s32.totalorder %s12, 1
    %p134 = por %p132, %p133
    %p135 = scmp.ne.s32.totalorder %s127, %s130
    %p136 = scmp.eq.s32.totalorder %s12, 0
    %p137 = por %p135, %p136
    %p138 = scmp.ne.s32.totalorder %s127, %s130
    %p139 = scmp.eq.s32.totalorder %s17, 1
    %p140 = por %p138, %p139
    %p141 = scmp.ne.s32.totalorder %s130, %s131
    %p142 = scmp.eq.s32.totalorder %s17, 0
    %p143 = por %p141, %p142
    %p144 = scmp.ne.s32.totalorder %s130, %s131
    %p145 = scmp.eq.s32.totalorder %s18, 1
    %p146 = por %p144, %p145
    %p148 = scmp.ne.s32.totalorder %s131, %s147
    %p149 = scmp.eq.s32.totalorder %s18, 0
    %p150 = por %p148, %p149
    %s151 = ssub.s32 %s19, %s38
    %s152 = ssub.s32 %s20, %s34
    %s153 = sor.u32 %s151, %s152
    %p154 = scmp.eq.s32.totalorder %s153, 0
    %s156 = sadd.s32 %s155, 1
    %s157 = scalar_select %p154, %s155, %s156
    %p160 = pneg %p154
    %p161 = scmp.eq.s32.totalorder %s12, 1
    %p162 = por %p160, %p161
    %p163 = scmp.ne.s32.totalorder %s155, %s158
    %p164 = scmp.eq.s32.totalorder %s12, 0
    %p165 = por %p163, %p164
    %p166 = scmp.ne.s32.totalorder %s155, %s158
    %p167 = scmp.eq.s32.totalorder %s17, 1
    %p168 = por %p166, %p167
    %p169 = scmp.ne.s32.totalorder %s158, %s159
    %p170 = scmp.eq.s32.totalorder %s17, 0
    %p171 = por %p169, %p170
    %p172 = scmp.ne.s32.totalorder %s158, %s159
    %p173 = scmp.eq.s32.totalorder %s18, 1
    %p174 = por %p172, %p173
    %p176 = scmp.ne.s32.totalorder %s159, %s175
    %p177 = scmp.eq.s32.totalorder %s18, 0
    %p178 = por %p176, %p177
    %s179 = ssub.s32 %s19, %s38
    %s180 = ssub.s32 %s20, %s34
    %s181 = sor.u32 %s179, %s180
    %p182 = scmp.eq.s32.totalorder %s181, 0
    %s184 = sadd.s32 %s183, 1
    %s185 = scalar_select %p182, %s183, %s184
    %p188 = pneg %p182
    %p189 = scmp.eq.s32.totalorder %s12, 1
    %p190 = por %p188, %p189
    %p191 = scmp.ne.s32.totalorder %s183, %s186
    %p192 = scmp.eq.s32.totalorder %s12, 0
    %p193 = por %p191, %p192
    %p194 = scmp.ne.s32.totalorder %s183, %s186
    %p195 = scmp.eq.s32.totalorder %s17, 1
    %p196 = por %p194, %p195
    %p197 = scmp.ne.s32.totalorder %s186, %s187
    %p198 = scmp.eq.s32.totalorder %s17, 0
    %p199 = por %p197, %p198
    %p200 = scmp.ne.s32.totalorder %s186, %s187
    %p201 = scmp.eq.s32.totalorder %s18, 1
    %p202 = por %p200, %p201
    %p204 = scmp.ne.s32.totalorder %s187, %s203
    %p205 = scmp.eq.s32.totalorder %s18, 0
    %p206 = por %p204, %p205
    %p207 = scmp.le.s32.totalorder 1, %s12
    %p208 = scmp.lt.s32.totalorder %s12, 3
    %p209 = pnand %p207, %p208
    %p210 = pneg %p209
    // Predicated region
    $region9: #{_lambda_.8} parent=5 // pred_check
      _
    $region10: #{_lambda_.8} parent=5 // pred_check_branch
      %212 = sbr.rel (%p209) target = $region12
    $region11: #{_lambda_.8} parent=5 // pred_region
      %s213 = ssub.s32 %s12, 1
      // Predicated region
      $region13: #{_lambda_.8} parent=11 // pred_check
        %p214 = pneg %p117
      $region14: #{_lambda_.8} parent=11 // pred_check_branch
        %216 = sbr.rel (%p214) target = $region16
      $region15: #{_lambda_.8} parent=11 // pred_region
        %s217 = smul.u32 32, %s24
        %p218 = scmp.lt.s32.totalorder %s217, 31
        %s219 = scalar_select %p218, %s217, 31
        %s220 = smul.addr %s219, 8
        %s221 = scalar_lea.vmem %s2, %s220
        %s222 = smul.u32 32, %s24
      $region16: #{_lambda_.8} parent=11 // pred_fallthru
        _
    $region12: #{_lambda_.8} parent=5 // pred_fallthru
      _
    %p223 = scmp.lt.s32.totalorder %s12, 2
    // Predicated region
    $region17: #{_lambda_.8} parent=5 // pred_check
      %p224 = pneg %p223
    $region18: #{_lambda_.8} parent=5 // pred_check_branch
      %226 = sbr.rel (%p224) target = $region20
    $region19: #{_lambda_.8} parent=5 // pred_region
      // Predicated region
      $region21: #{_lambda_.8} parent=19 // pred_check
        %p227 = pneg %p55
      $region22: #{_lambda_.8} parent=19 // pred_check_branch
        %229 = sbr.rel (%p227) target = $region24
      $region23: #{_lambda_.8} parent=19 // pred_region
        %s230 = smul.u32 2, %s21
        %p231 = scmp.lt.s32.totalorder %s19, 1
        %s232 = scalar_select %p231, %s19, 1
        %p233 = scmp.lt.s32.totalorder %s20, 0
        %s234 = scalar_select %p233, %s20, 0
        %p235 = scmp.lt.s32.totalorder %s230, 1
        %s236 = scalar_select %p235, %s230, 1
        %s237 = smul.addr %s234, 2
        %s238 = sadd.s32 %s236, %s237
        %s239 = smul.addr %s232, 2
        %s240 = sadd.s32 %s238, %s239
        %s241 = smul.addr %s240, 8
        %s242 = scalar_lea.vmem %s0, %s241
        %s243 = smul.u32 2, %s21
      $region24: #{_lambda_.8} parent=19 // pred_fallthru
        _
      // Predicated region
      $region25: #{_lambda_.8} parent=19 // pred_check
        %p244 = pneg %p85
      $region26: #{_lambda_.8} parent=19 // pred_check_branch
        %246 = sbr.rel (%p244) target = $region28
      $region27: #{_lambda_.8} parent=19 // pred_region
        %s247 = smul.u32 2, %s21
        %p248 = scmp.lt.s32.totalorder %s19, 1
        %s249 = scalar_select %p248, %s19, 1
        %p250 = scmp.lt.s32.totalorder %s20, 0
        %s251 = scalar_select %p250, %s20, 0
        %p252 = scmp.lt.s32.totalorder %s247, 1
        %s253 = scalar_select %p252, %s247, 1
        %s254 = smul.addr %s251, 2
        %s255 = sadd.s32 %s253, %s254
        %s256 = smul.addr %s249, 2
        %s257 = sadd.s32 %s255, %s256
        %s258 = smul.addr %s257, 8
        %s259 = scalar_lea.vmem %s1, %s258
        %s260 = smul.u32 2, %s21
      $region28: #{_lambda_.8} parent=19 // pred_fallthru
        _
    $region20: #{_lambda_.8} parent=5 // pred_fallthru
      _
    %p261 = scmp.le.s32.totalorder 1, %s12
    %p262 = scmp.lt.s32.totalorder %s12, 3
    %p263 = pnand %p261, %p262
    %p264 = pneg %p263
    // Predicated region
    $region29: #{_lambda_.8} parent=5 // pred_check
      _
    $region30: #{_lambda_.8} parent=5 // pred_check_branch
      %266 = sbr.rel (%p263) target = $region32
    $region31: #{_lambda_.8} parent=5 // pred_region
      %s267 = ssub.s32 %s12, 1
      %s268 = smul.u32 2, %s24
      %p269 = scmp.lt.s32.totalorder %s22, 1
      %s270 = scalar_select %p269, %s22, 1
      %p271 = scmp.lt.s32.totalorder %s23, 0
      %s272 = scalar_select %p271, %s23, 0
      %p273 = scmp.lt.s32.totalorder %s268, 1
      %s274 = scalar_select %p273, %s268, 1
      %s275 = smul.addr %s272, 2
      %s276 = sadd.s32 %s274, %s275
      %s277 = smul.addr %s270, 2
      %s278 = sadd.s32 %s276, %s277
      %s279 = smul.addr %s278, 8
      %s280 = scalar_lea.vmem %s0, %s279
      %p281 = pneg %p61
      %p282 = pneg %p58
      %s283 = smul.u32 2, %s24
      %p284 = scmp.lt.s32.totalorder %s22, 1
      %s285 = scalar_select %p284, %s22, 1
      %p286 = scmp.lt.s32.totalorder %s23, 0
      %s287 = scalar_select %p286, %s23, 0
      %p288 = scmp.lt.s32.totalorder %s283, 1
      %s289 = scalar_select %p288, %s283, 1
      %s290 = smul.addr %s287, 2
      %s291 = sadd.s32 %s289, %s290
      %s292 = smul.addr %s285, 2
      %s293 = sadd.s32 %s291, %s292
      %s294 = smul.addr %s293, 8
      %s295 = scalar_lea.vmem %s1, %s294
      %p296 = pneg %p91
      %p297 = pneg %p88
      %s298 = smul.u32 32, %s24
      %p299 = scmp.lt.s32.totalorder %s298, 31
      %s300 = scalar_select %p299, %s298, 31
      %s301 = smul.addr %s300, 8
      %s302 = scalar_lea.vmem %s2, %s301
      %p303 = pneg %p117
      %p304 = pneg %p114
      %p305 = pneg %p143
      %p306 = pneg %p140
      %p307 = scmp.lt.s32.totalorder %s22, 1
      %s308 = scalar_select %p307, %s22, 1
      %s309 = scalar_lea.vmem %s3, %s308
      %p310 = pneg %p171
      %p311 = pneg %p168
      %p312 = scmp.lt.s32.totalorder %s22, 1
      %s313 = scalar_select %p312, %s22, 1
      %p314 = scmp.lt.s32.totalorder %s23, 0
      %s315 = scalar_select %p314, %s23, 0
      %s316 = sadd.s32 %s315, %s313
      %s317 = smul.addr %s316, 8
      %s318 = scalar_lea.vmem %s4, %s317
      %p319 = pneg %p199
      %p320 = pneg %p196
      %p321 = scmp.lt.s32.totalorder %s22, 1
      %s322 = scalar_select %p321, %s22, 1
      %p323 = scmp.lt.s32.totalorder %s23, 0
      %s324 = scalar_select %p323, %s23, 0
      %s325 = sadd.s32 %s324, %s322
      %s326 = smul.addr %s325, 8
      %s327 = scalar_lea.vmem %s5, %s326
      %s328 = smul.u32 2, %s24
      %p329 = scmp.lt.s32.totalorder %s22, 1
      %s330 = scalar_select %p329, %s22, 1
      %p331 = scmp.lt.s32.totalorder %s23, 0
      %s332 = scalar_select %p331, %s23, 0
      %p333 = scmp.lt.s32.totalorder %s328, 1
      %s334 = scalar_select %p333, %s328, 1
      %s335 = smul.addr %s332, 2
      %s336 = sadd.s32 %s334, %s335
      %s337 = smul.addr %s330, 2
      %s338 = sadd.s32 %s336, %s337
      %s339 = smul.addr %s338, 8
      %s340 = scalar_lea.vmem %s0, %s339
      %s341 = smul.u32 2, %s24
      %s342 = smul.u32 2, %s24
      %p343 = scmp.lt.s32.totalorder %s22, 1
      %s344 = scalar_select %p343, %s22, 1
      %p345 = scmp.lt.s32.totalorder %s23, 0
      %s346 = scalar_select %p345, %s23, 0
      %p347 = scmp.lt.s32.totalorder %s342, 1
      %s348 = scalar_select %p347, %s342, 1
      %s349 = smul.addr %s346, 2
      %s350 = sadd.s32 %s348, %s349
      %s351 = smul.addr %s344, 2
      %s352 = sadd.s32 %s350, %s351
      %s353 = smul.addr %s352, 8
      %s354 = scalar_lea.vmem %s1, %s353
      %s355 = smul.u32 2, %s24
      %s356 = smul.u32 32, %s24
      %p357 = scmp.lt.s32.totalorder %s356, 31
      %s358 = scalar_select %p357, %s356, 31
      %s359 = smul.addr %s358, 8
      %s360 = scalar_lea.vmem %s2, %s359
      %s361 = smul.u32 32, %s24
      %p362 = scmp.lt.s32.totalorder %s22, 1
      %s363 = scalar_select %p362, %s22, 1
      %s364 = scalar_lea.vmem %s3, %s363
      %p365 = scmp.lt.s32.totalorder %s22, 1
      %s366 = scalar_select %p365, %s22, 1
      %p367 = scmp.lt.s32.totalorder %s23, 0
      %s368 = scalar_select %p367, %s23, 0
      %s369 = sadd.s32 %s368, %s366
      %s370 = smul.addr %s369, 8
      %s371 = scalar_lea.vmem %s4, %s370
      %p372 = scmp.lt.s32.totalorder %s22, 1
      %s373 = scalar_select %p372, %s22, 1
      %p374 = scmp.lt.s32.totalorder %s23, 0
      %s375 = scalar_select %p374, %s23, 0
      %s376 = sadd.s32 %s375, %s373
      %s377 = smul.addr %s376, 8
      %s378 = scalar_lea.vmem %s5, %s377
      %p379 = scmp.eq.s32.totalorder %s23, 0
      %p380 = scmp.eq.s32.totalorder %s24, 0
      %p381 = pnand %p379, %p380
      %p382 = pneg %p381
      // Predicated region
      $region33: #{_lambda_.8} parent=31 // pred_check
        _
      $region34: #{_lambda_.8} parent=31 // pred_check_branch
        %384 = sbr.rel (%p381) target = $region36
      $region35: #{_lambda_.8} parent=31 // pred_region
        %385 = vst [vmem:[#allocation2] sm:$0xff] 0.0
        %386 = vst [vmem:[#allocation2 + $0x8] sm:$0xff] 0.0
      $region36: #{_lambda_.8} parent=31 // pred_fallthru
        _
      // Predicated region
      $region37: #{_lambda_.8} parent=31 // pred_check
        %p387 = pneg %p380
      $region38: #{_lambda_.8} parent=31 // pred_check_branch
        %389 = sbr.rel (%p387) target = $region40
      $region39: #{_lambda_.8} parent=31 // pred_region
        %390 = vst [vmem:[#allocation3] sm:$0xff] 0.0
        %391 = vst [vmem:[#allocation4] sm:$0xff] 0.0
      $region40: #{_lambda_.8} parent=31 // pred_fallthru
        _
      %v392 = vld [vmem:[%s340] sm:$0xff]
      %v393 = vld [vmem:[%s340 + $0x8] sm:$0xff]
      %v394 = vld [vmem:[%s354] sm:$0xff]
      %v395 = vld [vmem:[%s354 + $0x8] sm:$0xff]
      %v396 = vld [vmem:[%s360] sm:$0xff]
      %v397 = vld [vmem:[%s360 + $0x8] sm:$0xff]
      %v398 = vld [vmem:[%s360 + $0x10] sm:$0xff]
      %v399 = vld [vmem:[%s360 + $0x18] sm:$0xff]
      %v400 = vld [vmem:[%s360 + $0x20] sm:$0xff]
      %v401 = vld [vmem:[%s360 + $0x28] sm:$0xff]
      %v402 = vld [vmem:[%s360 + $0x30] sm:$0xff]
      %v403 = vld [vmem:[%s360 + $0x38] sm:$0xff]
      %v404 = vld [vmem:[%s360 + $0x40] sm:$0xff]
      %v405 = vld [vmem:[%s360 + $0x48] sm:$0xff]
      %v406 = vld [vmem:[%s360 + $0x50] sm:$0xff]
      %v407 = vld [vmem:[%s360 + $0x58] sm:$0xff]
      %v408 = vld [vmem:[%s360 + $0x60] sm:$0xff]
      %v409 = vld [vmem:[%s360 + $0x68] sm:$0xff]
      %v410 = vld [vmem:[%s360 + $0x70] sm:$0xff]
      %v411 = vld [vmem:[%s360 + $0x78] sm:$0xff]
      %v412 = vld [vmem:[%s360 + $0x80] sm:$0xff]
      %v413 = vld [vmem:[%s360 + $0x88] sm:$0xff]
      %v414 = vld [vmem:[%s360 + $0x90] sm:$0xff]
      %v415 = vld [vmem:[%s360 + $0x98] sm:$0xff]
      %v416 = vld [vmem:[%s360 + $0xa0] sm:$0xff]
      %v417 = vld [vmem:[%s360 + $0xa8] sm:$0xff]
      %v418 = vld [vmem:[%s360 + $0xb0] sm:$0xff]
      %v419 = vld [vmem:[%s360 + $0xb8] sm:$0xff]
      %v420 = vld [vmem:[%s360 + $0xc0] sm:$0xff]
      %v421 = vld [vmem:[%s360 + $0xc8] sm:$0xff]
      %v422 = vld [vmem:[%s360 + $0xd0] sm:$0xff]
      %v423 = vld [vmem:[%s360 + $0xd8] sm:$0xff]
      %v424 = vld [vmem:[%s360 + $0xe0] sm:$0xff]
      %v425 = vld [vmem:[%s360 + $0xe8] sm:$0xff]
      %v426 = vld [vmem:[%s360 + $0xf0] sm:$0xff]
      %v427 = vld [vmem:[%s360 + $0xf8] sm:$0xff]
      %v428 = vld [vmem:[#allocation2] sm:$0xff]
      %v429 = vld [vmem:[#allocation2 + $0x8] sm:$0xff]
      %v430 = vsub.f32 %v392, %v394
      %v431 = vsub.f32 %v393, %v395
      %v432 = vand.u32 2147483647, %v430
      %v433 = vand.u32 2147483647, %v431
      %v434 = vadd.f32 %v428, %v432
      %v435 = vadd.f32 %v429, %v433
      %436 = vst [vmem:[#allocation2] sm:$0xff] %v434
      %437 = vst [vmem:[#allocation2 + $0x8] sm:$0xff] %v435
      %v438 = vld [vmem:[#allocation3] sm:$0xff]
      %439 = vmatprep.subr.mxu0 0.0
      %440 = vmatpush1.msra.mxu0 %v396
      %441 = vmatprep.subr.mxu0 0.0
      %442 = vmatpush1.msra.mxu0 %v397
      %443 = vmatprep.subr.mxu0 0.0
      %444 = vmatpush1.msra.mxu0 %v398
      %445 = vmatprep.subr.mxu0 0.0
      %446 = vmatpush1.msra.mxu0 %v399
      %447 = vmatprep.subr.mxu0 0.0
      %448 = vmatpush1.msra.mxu0 %v400
      %449 = vmatprep.subr.mxu0 0.0
      %450 = vmatpush1.msra.mxu0 %v401
      %451 = vmatprep.subr.mxu0 0.0
      %452 = vmatpush1.msra.mxu0 %v402
      %453 = vmatprep.subr.mxu0 0.0
      %454 = vmatpush1.msra.mxu0 %v403
      %455 = vmatprep.subr.mxu0 0.0
      %456 = vmatpush1.msra.mxu0 %v404
      %457 = vmatprep.subr.mxu0 0.0
      %458 = vmatpush1.msra.mxu0 %v405
      %459 = vmatprep.subr.mxu0 0.0
      %460 = vmatpush1.msra.mxu0 %v406
      %461 = vmatprep.subr.mxu0 0.0
      %462 = vmatpush1.msra.mxu0 %v407
      %463 = vmatprep.subr.mxu0 0.0
      %464 = vmatpush1.msra.mxu0 %v408
      %465 = vmatprep.subr.mxu0 0.0
      %466 = vmatpush1.msra.mxu0 %v409
      %467 = vmatprep.subr.mxu0 0.0
      %468 = vmatpush1.msra.mxu0 %v410
      %469 = vmatprep.subr.mxu0 0.0
      %470 = vmatpush1.msra.mxu0 %v411
      %471 = vmatprep.subr.mxu0 0.0
      %472 = vmatpush1.msra.mxu0 %v412
      %473 = vmatprep.subr.mxu0 0.0
      %474 = vmatpush1.msra.mxu0 %v413
      %475 = vmatprep.subr.mxu0 0.0
      %476 = vmatpush1.msra.mxu0 %v414
      %477 = vmatprep.subr.mxu0 0.0
      %478 = vmatpush1.msra.mxu0 %v415
      %479 = vmatprep.subr.mxu0 0.0
      %480 = vmatpush1.msra.mxu0 %v416
      %481 = vmatprep.subr.mxu0 0.0
      %482 = vmatpush1.msra.mxu0 %v417
      %483 = vmatprep.subr.mxu0 0.0
      %484 = vmatpush1.msra.mxu0 %v418
      %485 = vmatprep.subr.mxu0 0.0
      %486 = vmatpush1.msra.mxu0 %v419
      %487 = vmatprep.subr.mxu0 0.0
      %488 = vmatpush1.msra.mxu0 %v420
      %489 = vmatprep.subr.mxu0 0.0
      %490 = vmatpush1.msra.mxu0 %v421
      %491 = vmatprep.subr.mxu0 0.0
      %492 = vmatpush1.msra.mxu0 %v422
      %493 = vmatprep.subr.mxu0 0.0
      %494 = vmatpush1.msra.mxu0 %v423
      %495 = vmatprep.subr.mxu0 0.0
      %496 = vmatpush1.msra.mxu0 %v424
      %497 = vmatprep.subr.mxu0 0.0
      %498 = vmatpush1.msra.mxu0 %v425
      %499 = vmatprep.subr.mxu0 0.0
      %500 = vmatpush1.msra.mxu0 %v426
      %501 = vmatprep.subr.mxu0 0.0
      %502 = vmatpush1.msra.mxu0 %v427
      %503 = vmatprep.mubr.f32.mxu0 %v393
      %504 = vmatmul.mubr.f32.gmra.mrb[0].mxu0 %v392
      %v505 = vpop.f32.mrb[0].mxu0
      %v506 = vadd.f32 0.0, %v505
      %v507 = vpop.f32.mrb[0].mxu0
      %508 = vdwg.mxu0
      %v509 = vadd.f32 %v438, %v506
      %510 = vst [vmem:[#allocation3] sm:$0xff] %v509
      %v511 = vld [vmem:[#allocation4] sm:$0xff]
      %512 = vmatprep.subr.mxu0 0.0
      %513 = vmatpush1.msra.mxu0 %v396
      %514 = vmatprep.subr.mxu0 0.0
      %515 = vmatpush1.msra.mxu0 %v397
      %516 = vmatprep.subr.mxu0 0.0
      %517 = vmatpush1.msra.mxu0 %v398
      %518 = vmatprep.subr.mxu0 0.0
      %519 = vmatpush1.msra.mxu0 %v399
      %520 = vmatprep.subr.mxu0 0.0
      %521 = vmatpush1.msra.mxu0 %v400
      %522 = vmatprep.subr.mxu0 0.0
      %523 = vmatpush1.msra.mxu0 %v401
      %524 = vmatprep.subr.mxu0 0.0
      %525 = vmatpush1.msra.mxu0 %v402
      %526 = vmatprep.subr.mxu0 0.0
      %527 = vmatpush1.msra.mxu0 %v403
      %528 = vmatprep.subr.mxu0 0.0
      %529 = vmatpush1.msra.mxu0 %v404
      %530 = vmatprep.subr.mxu0 0.0
      %531 = vmatpush1.msra.mxu0 %v405
      %532 = vmatprep.subr.mxu0 0.0
      %533 = vmatpush1.msra.mxu0 %v406
      %534 = vmatprep.subr.mxu0 0.0
      %535 = vmatpush1.msra.mxu0 %v407
      %536 = vmatprep.subr.mxu0 0.0
      %537 = vmatpush1.msra.mxu0 %v408
      %538 = vmatprep.subr.mxu0 0.0
      %539 = vmatpush1.msra.mxu0 %v409
      %540 = vmatprep.subr.mxu0 0.0
      %541 = vmatpush1.msra.mxu0 %v410
      %542 = vmatprep.subr.mxu0 0.0
      %543 = vmatpush1.msra.mxu0 %v411
      %544 = vmatprep.subr.mxu0 0.0
      %545 = vmatpush1.msra.mxu0 %v412
      %546 = vmatprep.subr.mxu0 0.0
      %547 = vmatpush1.msra.mxu0 %v413
      %548 = vmatprep.subr.mxu0 0.0
      %549 = vmatpush1.msra.mxu0 %v414
      %550 = vmatprep.subr.mxu0 0.0
      %551 = vmatpush1.msra.mxu0 %v415
      %552 = vmatprep.subr.mxu0 0.0
      %553 = vmatpush1.msra.mxu0 %v416
      %554 = vmatprep.subr.mxu0 0.0
      %555 = vmatpush1.msra.mxu0 %v417
      %556 = vmatprep.subr.mxu0 0.0
      %557 = vmatpush1.msra.mxu0 %v418
      %558 = vmatprep.subr.mxu0 0.0
      %559 = vmatpush1.msra.mxu0 %v419
      %560 = vmatprep.subr.mxu0 0.0
      %561 = vmatpush1.msra.mxu0 %v420
      %562 = vmatprep.subr.mxu0 0.0
      %563 = vmatpush1.msra.mxu0 %v421
      %564 = vmatprep.subr.mxu0 0.0
      %565 = vmatpush1.msra.mxu0 %v422
      %566 = vmatprep.subr.mxu0 0.0
      %567 = vmatpush1.msra.mxu0 %v423
      %568 = vmatprep.subr.mxu0 0.0
      %569 = vmatpush1.msra.mxu0 %v424
      %570 = vmatprep.subr.mxu0 0.0
      %571 = vmatpush1.msra.mxu0 %v425
      %572 = vmatprep.subr.mxu0 0.0
      %573 = vmatpush1.msra.mxu0 %v426
      %574 = vmatprep.subr.mxu0 0.0
      %575 = vmatpush1.msra.mxu0 %v427
      %576 = vmatprep.mubr.f32.mxu0 %v395
      %577 = vmatmul.mubr.f32.gmra.mrb[0].mxu0 %v394
      %v578 = vpop.f32.mrb[0].mxu0
      %v579 = vadd.f32 0.0, %v578
      %v580 = vpop.f32.mrb[0].mxu0
      %581 = vdwg.mxu0
      %v582 = vadd.f32 %v511, %v579
      %583 = vst [vmem:[#allocation4] sm:$0xff] %v582
      // Predicated region
      $region41: #{_lambda_.8} parent=31 // pred_check
        %p584 = pneg %p380
      $region42: #{_lambda_.8} parent=31 // pred_check_branch
        %586 = sbr.rel (%p584) target = $region44
      $region43: #{_lambda_.8} parent=31 // pred_region
        %v587 = vld [vmem:[#allocation3] sm:$0xff]
        %588 = vst [vmem:[%s371] sm:$0xff] %v587
        %v589 = vld [vmem:[#allocation4] sm:$0xff]
        %590 = vst [vmem:[%s378] sm:$0xff] %v589
      $region44: #{_lambda_.8} parent=31 // pred_fallthru
        _
      // Predicated region
      $region45: #{_lambda_.8} parent=31 // pred_check
        _
      $region46: #{_lambda_.8} parent=31 // pred_check_branch
        %592 = sbr.rel (%p381) target = $region48
      $region47: #{_lambda_.8} parent=31 // pred_region
        %v593 = vld [vmem:[#allocation2] sm:$0xff]
        %v594 = vld [vmem:[#allocation2 + $0x8] sm:$0xff]
        %v595 = vadd.f32 %v593, %v594
        %596 = vadd.xlane.f32.xlu0 %v595
        %v597 = vpop.xlane.xlu0 %596
        %v598 = vrot.slane %v597, 4
        %v599 = vadd.f32 %v597, %v598
        %v600 = vrot.slane %v599, 2
        %v601 = vadd.f32 %v599, %v600
        %v602 = vrot.slane %v601, 1
        %v603 = vadd.f32 %v601, %v602
        %s604 = vtos %v603
        %v605 = vstv %s604
        %606 = vst [vmem:[%s364] sm:$0x1] %v605
      $region48: #{_lambda_.8} parent=31 // pred_fallthru
        _
      %p607 = scmp.lt.s32.totalorder %s22, 1
      %s608 = scalar_select %p607, %s22, 1
      %s609 = scalar_lea.vmem %s3, %s608
      %p610 = scmp.lt.s32.totalorder %s22, 1
      %s611 = scalar_select %p610, %s22, 1
      %p612 = scmp.lt.s32.totalorder %s23, 0
      %s613 = scalar_select %p612, %s23, 0
      %s614 = sadd.s32 %s613, %s611
      %s615 = smul.addr %s614, 8
      %s616 = scalar_lea.vmem %s4, %s615
      %p617 = scmp.lt.s32.totalorder %s22, 1
      %s618 = scalar_select %p617, %s22, 1
      %p619 = scmp.lt.s32.totalorder %s23, 0
      %s620 = scalar_select %p619, %s23, 0
      %s621 = sadd.s32 %s620, %s618
      %s622 = smul.addr %s621, 8
      %s623 = scalar_lea.vmem %s5, %s622
      // Predicated region
      $region49: #{_lambda_.8} parent=31 // pred_check
        %p624 = pneg %p140
      $region50: #{_lambda_.8} parent=31 // pred_check_branch
        %626 = sbr.rel (%p624) target = $region52
      $region51: #{_lambda_.8} parent=31 // pred_region
        _
      $region52: #{_lambda_.8} parent=31 // pred_fallthru
        _
      // Predicated region
      $region53: #{_lambda_.8} parent=31 // pred_check
        %p627 = pneg %p168
      $region54: #{_lambda_.8} parent=31 // pred_check_branch
        %629 = sbr.rel (%p627) target = $region56
      $region55: #{_lambda_.8} parent=31 // pred_region
        _
      $region56: #{_lambda_.8} parent=31 // pred_fallthru
        _
      // Predicated region
      $region57: #{_lambda_.8} parent=31 // pred_check
        %p630 = pneg %p196
      $region58: #{_lambda_.8} parent=31 // pred_check_branch
        %632 = sbr.rel (%p630) target = $region60
      $region59: #{_lambda_.8} parent=31 // pred_region
        _
      $region60: #{_lambda_.8} parent=31 // pred_fallthru
        _
    $region32: #{_lambda_.8} parent=5 // pred_fallthru
      _
    %p633 = scmp.le.s32.totalorder 2, %s12
    // Predicated region
    $region61: #{_lambda_.8} parent=5 // pred_check
      %p634 = pneg %p633
    $region62: #{_lambda_.8} parent=5 // pred_check_branch
      %636 = sbr.rel (%p634) target = $region64
    $region63: #{_lambda_.8} parent=5 // pred_region
      %s637 = ssub.s32 %s12, 2
      // Predicated region
      $region65: #{_lambda_.8} parent=63 // pred_check
        %p638 = pneg %p146
      $region66: #{_lambda_.8} parent=63 // pred_check_branch
        %640 = sbr.rel (%p638) target = $region68
      $region67: #{_lambda_.8} parent=63 // pred_region
        %p641 = scmp.lt.s32.totalorder %s25, 1
        %s642 = scalar_select %p641, %s25, 1
        %s643 = scalar_lea.vmem %s3, %s642
      $region68: #{_lambda_.8} parent=63 // pred_fallthru
        _
      // Predicated region
      $region69: #{_lambda_.8} parent=63 // pred_check
        %p644 = pneg %p174
      $region70: #{_lambda_.8} parent=63 // pred_check_branch
        %646 = sbr.rel (%p644) target = $region72
      $region71: #{_lambda_.8} parent=63 // pred_region
        %p647 = scmp.lt.s32.totalorder %s25, 1
        %s648 = scalar_select %p647, %s25, 1
        %p649 = scmp.lt.s32.totalorder %s26, 0
        %s650 = scalar_select %p649, %s26, 0
        %s651 = sadd.s32 %s650, %s648
        %s652 = smul.addr %s651, 8
        %s653 = scalar_lea.vmem %s4, %s652
      $region72: #{_lambda_.8} parent=63 // pred_fallthru
        _
      // Predicated region
      $region73: #{_lambda_.8} parent=63 // pred_check
        %p654 = pneg %p202
      $region74: #{_lambda_.8} parent=63 // pred_check_branch
        %656 = sbr.rel (%p654) target = $region76
      $region75: #{_lambda_.8} parent=63 // pred_region
        %p657 = scmp.lt.s32.totalorder %s25, 1
        %s658 = scalar_select %p657, %s25, 1
        %p659 = scmp.lt.s32.totalorder %s26, 0
        %s660 = scalar_select %p659, %s26, 0
        %s661 = sadd.s32 %s660, %s658
        %s662 = smul.addr %s661, 8
        %s663 = scalar_lea.vmem %s5, %s662
      $region76: #{_lambda_.8} parent=63 // pred_fallthru
        _
    $region64: #{_lambda_.8} parent=5 // pred_fallthru
      _
  $region6: #{_lambda_.8} parent=0 // loop_footer
    %s16 = sadd.s32 1, %s12
  $region7: #{_lambda_.8} parent=0 // loop_footer_branch
    %11 = sbr.rel target = $region3
  $region8: #{_lambda_.8} parent=0 // loop_exit
    _

// kernel: _lambda_.9
$region0: #{_lambda_.9}
  #allocation0 [shape = 'u32[]', space=smem, size = 0x4, offset = 0x4, fixed_abs, tag = 'smem constant byte address 0x4 - core index']
  #allocation1 [shape = 'u32[144,128]{1,0:T(1,128)}', space=vmem, size = 0x12000, scoped, tag = 'internal scratch']
  #allocation2 [shape = 'f32[8,64]{1,0:T(8,128)}', space=vmem, size = 0x1000, scoped, tag = 'scratch operand']
  %s0 = inlined_call_operand.vmem [shape: f32[2,32,64], index: 0, kind: input, shape index: {}]
  %s1 = inlined_call_operand.vmem [shape: f32[2,32,64], index: 1, kind: input, shape index: {}]
  %s2 = inlined_call_operand.vmem [shape: f32[2,1,128], index: 2, kind: output, shape index: {}]
  %s3 = sld [smem:[#allocation0]]
  $region49: #{_lambda_.9} parent=0
    _
  %s5 = ssub.s32 1, %s3
  %s6 = scalar_select 0, %s5, %s3
  loop: start=0, step=1, limit=4
  $region2: #{_lambda_.9} parent=0 // loop_pre_header
    _
  $region3: #{_lambda_.9} parent=0 // loop_header
    %s8 = sphi 0, %s12
    %p9 = scmp.ge.s32.totalorder %s8, 4
    %s15 = sphi 0, %s34
    %s16 = sphi 0, %s30
    %s17 = sphi 0, %s26
    %s18 = sphi 0, %s15
    %s19 = sphi 0, %s16
    %s20 = sphi 0, %s17
    %s21 = sphi 0, %s18
    %s22 = sphi 0, %s19
    %s23 = sphi 0, %s20
    %s41 = sphi 0, %s43
    %s44 = sphi 0, %s41
    %s45 = sphi 0, %s44
    %s61 = sphi 0, %s45
    %s71 = sphi 0, %s73
    %s74 = sphi 0, %s71
    %s75 = sphi 0, %s74
    %s91 = sphi 0, %s75
    %s97 = sphi 0, %s99
    %s100 = sphi 0, %s97
    %s101 = sphi 0, %s100
    %s117 = sphi 0, %s101
  $region4: #{_lambda_.9} parent=0 // loop_header_branch
    %11 = sbr.rel (%p9) target = $region8
  $region5: #{_lambda_.9} parent=0 // loop_body
    %s13 = ssub.s32 %s8, 1
    %s14 = ssub.s32 %s8, 2
    %s24 = sadd.s32 1, %s17
    %p25 = scmp.ge.s32.totalorder %s24, 1
    %s26 = scalar_select %p25, 0, %s24
    %s27 = sadd.s32 1, %s16
    %s28 = scalar_select %p25, %s27, %s16
    %p29 = scmp.ge.s32.totalorder %s28, 1
    %s30 = scalar_select %p29, 0, %s28
    %s31 = sadd.s32 1, %s15
    %s32 = scalar_select %p29, %s31, %s15
    %p33 = scmp.ge.s32.totalorder %s32, 2
    %s34 = scalar_select %p33, 0, %s32
    %s35 = ssub.s32 %s15, %s34
    %s36 = ssub.s32 %s16, %s30
    %s37 = sor.u32 %s35, %s36
    %s38 = ssub.s32 %s17, %s26
    %s39 = sor.u32 %s37, %s38
    %p40 = scmp.eq.s32.totalorder %s39, 0
    %s42 = sadd.s32 %s41, 1
    %s43 = scalar_select %p40, %s41, %s42
    %p46 = pneg %p40
    %p47 = scmp.eq.s32.totalorder %s8, 1
    %p48 = por %p46, %p47
    %p49 = scmp.ne.s32.totalorder %s41, %s44
    %p50 = scmp.eq.s32.totalorder %s8, 0
    %p51 = por %p49, %p50
    %p52 = scmp.ne.s32.totalorder %s41, %s44
    %p53 = scmp.eq.s32.totalorder %s13, 1
    %p54 = por %p52, %p53
    %p55 = scmp.ne.s32.totalorder %s44, %s45
    %p56 = scmp.eq.s32.totalorder %s13, 0
    %p57 = por %p55, %p56
    %p58 = scmp.ne.s32.totalorder %s44, %s45
    %p59 = scmp.eq.s32.totalorder %s14, 1
    %p60 = por %p58, %p59
    %p62 = scmp.ne.s32.totalorder %s45, %s61
    %p63 = scmp.eq.s32.totalorder %s14, 0
    %p64 = por %p62, %p63
    %s65 = ssub.s32 %s15, %s34
    %s66 = ssub.s32 %s16, %s30
    %s67 = sor.u32 %s65, %s66
    %s68 = ssub.s32 %s17, %s26
    %s69 = sor.u32 %s67, %s68
    %p70 = scmp.eq.s32.totalorder %s69, 0
    %s72 = sadd.s32 %s71, 1
    %s73 = scalar_select %p70, %s71, %s72
    %p76 = pneg %p70
    %p77 = scmp.eq.s32.totalorder %s8, 1
    %p78 = por %p76, %p77
    %p79 = scmp.ne.s32.totalorder %s71, %s74
    %p80 = scmp.eq.s32.totalorder %s8, 0
    %p81 = por %p79, %p80
    %p82 = scmp.ne.s32.totalorder %s71, %s74
    %p83 = scmp.eq.s32.totalorder %s13, 1
    %p84 = por %p82, %p83
    %p85 = scmp.ne.s32.totalorder %s74, %s75
    %p86 = scmp.eq.s32.totalorder %s13, 0
    %p87 = por %p85, %p86
    %p88 = scmp.ne.s32.totalorder %s74, %s75
    %p89 = scmp.eq.s32.totalorder %s14, 1
    %p90 = por %p88, %p89
    %p92 = scmp.ne.s32.totalorder %s75, %s91
    %p93 = scmp.eq.s32.totalorder %s14, 0
    %p94 = por %p92, %p93
    %s95 = ssub.s32 %s15, %s34
    %p96 = scmp.eq.s32.totalorder %s95, 0
    %s98 = sadd.s32 %s97, 1
    %s99 = scalar_select %p96, %s97, %s98
    %p102 = pneg %p96
    %p103 = scmp.eq.s32.totalorder %s8, 1
    %p104 = por %p102, %p103
    %p105 = scmp.ne.s32.totalorder %s97, %s100
    %p106 = scmp.eq.s32.totalorder %s8, 0
    %p107 = por %p105, %p106
    %p108 = scmp.ne.s32.totalorder %s97, %s100
    %p109 = scmp.eq.s32.totalorder %s13, 1
    %p110 = por %p108, %p109
    %p111 = scmp.ne.s32.totalorder %s100, %s101
    %p112 = scmp.eq.s32.totalorder %s13, 0
    %p113 = por %p111, %p112
    %p114 = scmp.ne.s32.totalorder %s100, %s101
    %p115 = scmp.eq.s32.totalorder %s14, 1
    %p116 = por %p114, %p115
    %p118 = scmp.ne.s32.totalorder %s101, %s117
    %p119 = scmp.eq.s32.totalorder %s14, 0
    %p120 = por %p118, %p119
    %p121 = scmp.le.s32.totalorder 1, %s8
    %p122 = scmp.lt.s32.totalorder %s8, 3
    %p123 = pnand %p121, %p122
    %p124 = pneg %p123
    // Predicated region
    $region9: #{_lambda_.9} parent=5 // pred_check
      _
    $region10: #{_lambda_.9} parent=5 // pred_check_branch
      %126 = sbr.rel (%p123) target = $region12
    $region11: #{_lambda_.9} parent=5 // pred_region
      %s127 = ssub.s32 %s8, 1
    $region12: #{_lambda_.9} parent=5 // pred_fallthru
      _
    %p128 = scmp.lt.s32.totalorder %s8, 2
    // Predicated region
    $region13: #{_lambda_.9} parent=5 // pred_check
      %p129 = pneg %p128
    $region14: #{_lambda_.9} parent=5 // pred_check_branch
      %131 = sbr.rel (%p129) target = $region16
    $region15: #{_lambda_.9} parent=5 // pred_region
      // Predicated region
      $region17: #{_lambda_.9} parent=15 // pred_check
        %p132 = pneg %p51
      $region18: #{_lambda_.9} parent=15 // pred_check_branch
        %134 = sbr.rel (%p132) target = $region20
      $region19: #{_lambda_.9} parent=15 // pred_region
        %s135 = smul.u32 4, %s16
        %p136 = scmp.lt.s32.totalorder %s15, 1
        %s137 = scalar_select %p136, %s15, 1
        %p138 = scmp.lt.s32.totalorder %s135, 3
        %s139 = scalar_select %p138, %s135, 3
        %p140 = scmp.lt.s32.totalorder %s17, 0
        %s141 = scalar_select %p140, %s17, 0
        %s142 = sadd.s32 %s141, %s139
        %s143 = smul.addr %s137, 4
        %s144 = sadd.s32 %s142, %s143
        %s145 = smul.addr %s144, 8
        %s146 = scalar_lea.vmem %s0, %s145
        %s147 = smul.u32 4, %s16
      $region20: #{_lambda_.9} parent=15 // pred_fallthru
        _
      // Predicated region
      $region21: #{_lambda_.9} parent=15 // pred_check
        %p148 = pneg %p81
      $region22: #{_lambda_.9} parent=15 // pred_check_branch
        %150 = sbr.rel (%p148) target = $region24
      $region23: #{_lambda_.9} parent=15 // pred_region
        %s151 = smul.u32 4, %s16
        %p152 = scmp.lt.s32.totalorder %s15, 1
        %s153 = scalar_select %p152, %s15, 1
        %p154 = scmp.lt.s32.totalorder %s151, 3
        %s155 = scalar_select %p154, %s151, 3
        %p156 = scmp.lt.s32.totalorder %s17, 0
        %s157 = scalar_select %p156, %s17, 0
        %s158 = sadd.s32 %s157, %s155
        %s159 = smul.addr %s153, 4
        %s160 = sadd.s32 %s158, %s159
        %s161 = smul.addr %s160, 8
        %s162 = scalar_lea.vmem %s1, %s161
        %s163 = smul.u32 4, %s16
      $region24: #{_lambda_.9} parent=15 // pred_fallthru
        _
    $region16: #{_lambda_.9} parent=5 // pred_fallthru
      _
    %p164 = scmp.le.s32.totalorder 1, %s8
    %p165 = scmp.lt.s32.totalorder %s8, 3
    %p166 = pnand %p164, %p165
    %p167 = pneg %p166
    // Predicated region
    $region25: #{_lambda_.9} parent=5 // pred_check
      _
    $region26: #{_lambda_.9} parent=5 // pred_check_branch
      %169 = sbr.rel (%p166) target = $region28
    $region27: #{_lambda_.9} parent=5 // pred_region
      %s170 = ssub.s32 %s8, 1
      %s171 = smul.u32 4, %s19
      %p172 = scmp.lt.s32.totalorder %s18, 1
      %s173 = scalar_select %p172, %s18, 1
      %p174 = scmp.lt.s32.totalorder %s171, 3
      %s175 = scalar_select %p174, %s171, 3
      %p176 = scmp.lt.s32.totalorder %s20, 0
      %s177 = scalar_select %p176, %s20, 0
      %s178 = sadd.s32 %s177, %s175
      %s179 = smul.addr %s173, 4
      %s180 = sadd.s32 %s178, %s179
      %s181 = smul.addr %s180, 8
      %s182 = scalar_lea.vmem %s0, %s181
      %p183 = pneg %p57
      %p184 = pneg %p54
      %s185 = smul.u32 4, %s19
      %p186 = scmp.lt.s32.totalorder %s18, 1
      %s187 = scalar_select %p186, %s18, 1
      %p188 = scmp.lt.s32.totalorder %s185, 3
      %s189 = scalar_select %p188, %s185, 3
      %p190 = scmp.lt.s32.totalorder %s20, 0
      %s191 = scalar_select %p190, %s20, 0
      %s192 = sadd.s32 %s191, %s189
      %s193 = smul.addr %s187, 4
      %s194 = sadd.s32 %s192, %s193
      %s195 = smul.addr %s194, 8
      %s196 = scalar_lea.vmem %s1, %s195
      %p197 = pneg %p87
      %p198 = pneg %p84
      %p199 = pneg %p113
      %p200 = pneg %p110
      %p201 = scmp.lt.s32.totalorder %s18, 1
      %s202 = scalar_select %p201, %s18, 1
      %s203 = scalar_lea.vmem %s2, %s202
      %s204 = smul.u32 4, %s19
      %p205 = scmp.lt.s32.totalorder %s18, 1
      %s206 = scalar_select %p205, %s18, 1
      %p207 = scmp.lt.s32.totalorder %s204, 3
      %s208 = scalar_select %p207, %s204, 3
      %p209 = scmp.lt.s32.totalorder %s20, 0
      %s210 = scalar_select %p209, %s20, 0
      %s211 = sadd.s32 %s210, %s208
      %s212 = smul.addr %s206, 4
      %s213 = sadd.s32 %s211, %s212
      %s214 = smul.addr %s213, 8
      %s215 = scalar_lea.vmem %s0, %s214
      %s216 = smul.u32 4, %s19
      %s217 = smul.u32 4, %s19
      %p218 = scmp.lt.s32.totalorder %s18, 1
      %s219 = scalar_select %p218, %s18, 1
      %p220 = scmp.lt.s32.totalorder %s217, 3
      %s221 = scalar_select %p220, %s217, 3
      %p222 = scmp.lt.s32.totalorder %s20, 0
      %s223 = scalar_select %p222, %s20, 0
      %s224 = sadd.s32 %s223, %s221
      %s225 = smul.addr %s219, 4
      %s226 = sadd.s32 %s224, %s225
      %s227 = smul.addr %s226, 8
      %s228 = scalar_lea.vmem %s1, %s227
      %s229 = smul.u32 4, %s19
      %p230 = scmp.lt.s32.totalorder %s18, 1
      %s231 = scalar_select %p230, %s18, 1
      %s232 = scalar_lea.vmem %s2, %s231
      %p233 = scmp.eq.s32.totalorder %s19, 0
      %p234 = scmp.eq.s32.totalorder %s20, 0
      %p235 = pnand %p233, %p234
      %p236 = pneg %p235
      // Predicated region
      $region29: #{_lambda_.9} parent=27 // pred_check
        _
      $region30: #{_lambda_.9} parent=27 // pred_check_branch
        %238 = sbr.rel (%p235) target = $region32
      $region31: #{_lambda_.9} parent=27 // pred_region
        %vm239 = vcmask 523264
        %240 = vst.msk [vmem:[#allocation2] sm:$0xff] %vm239, 0.0
      $region32: #{_lambda_.9} parent=27 // pred_fallthru
        _
      %v241 = vld [vmem:[%s215] sm:$0xff]
      %v242 = vld [vmem:[%s215 + $0x8] sm:$0xff]
      %v243 = vld [vmem:[%s215 + $0x10] sm:$0xff]
      %v244 = vld [vmem:[%s215 + $0x18] sm:$0xff]
      %v245 = vld [vmem:[%s228] sm:$0xff]
      %v246 = vld [vmem:[%s228 + $0x8] sm:$0xff]
      %v247 = vld [vmem:[%s228 + $0x10] sm:$0xff]
      %v248 = vld [vmem:[%s228 + $0x18] sm:$0xff]
      %v249 = vld [vmem:[#allocation2] sm:$0xff]
      %v250 = vsub.f32 %v241, %v245
      %v251 = vsub.f32 %v242, %v246
      %v252 = vsub.f32 %v243, %v247
      %v253 = vsub.f32 %v244, %v248
      %v254 = vand.u32 2147483647, %v250
      %v255 = vand.u32 2147483647, %v251
      %v256 = vand.u32 2147483647, %v252
      %v257 = vand.u32 2147483647, %v253
      %v258 = vadd.f32 %v254, %v255
      %v259 = vadd.f32 %v258, %v256
      %v260 = vadd.f32 %v259, %v257
      %v261 = vadd.f32 %v249, %v260
      %vm262 = vcmask 523264
      %263 = vst.msk [vmem:[#allocation2] sm:$0xff] %vm262, %v261
      // Predicated region
      $region33: #{_lambda_.9} parent=27 // pred_check
        _
      $region34: #{_lambda_.9} parent=27 // pred_check_branch
        %265 = sbr.rel (%p235) target = $region36
      $region35: #{_lambda_.9} parent=27 // pred_region
        %v266 = vld [vmem:[#allocation2] sm:$0xff]
        %v267 = vsel %vm262, %v266, 0.0
        %268 = vadd.xlane.f32.xlu0 %v267
        %v269 = vpop.xlane.xlu0 %268
        %v270 = vrot.slane %v269, 4
        %v271 = vadd.f32 %v269, %v270
        %v272 = vrot.slane %v271, 2
        %v273 = vadd.f32 %v271, %v272
        %v274 = vrot.slane %v273, 1
        %v275 = vadd.f32 %v273, %v274
        %s276 = vtos %v275
        %v277 = vstv %s276
        %278 = vst [vmem:[%s232] sm:$0x1] %v277
      $region36: #{_lambda_.9} parent=27 // pred_fallthru
        _
      %p279 = scmp.lt.s32.totalorder %s18, 1
      %s280 = scalar_select %p279, %s18, 1
      %s281 = scalar_lea.vmem %s2, %s280
      // Predicated region
      $region37: #{_lambda_.9} parent=27 // pred_check
        %p282 = pneg %p110
      $region38: #{_lambda_.9} parent=27 // pred_check_branch
        %284 = sbr.rel (%p282) target = $region40
      $region39: #{_lambda_.9} parent=27 // pred_region
        _
      $region40: #{_lambda_.9} parent=27 // pred_fallthru
        _
    $region28: #{_lambda_.9} parent=5 // pred_fallthru
      _
    %p285 = scmp.le.s32.totalorder 2, %s8
    // Predicated region
    $region41: #{_lambda_.9} parent=5 // pred_check
      %p286 = pneg %p285
    $region42: #{_lambda_.9} parent=5 // pred_check_branch
      %288 = sbr.rel (%p286) target = $region44
    $region43: #{_lambda_.9} parent=5 // pred_region
      %s289 = ssub.s32 %s8, 2
      // Predicated region
      $region45: #{_lambda_.9} parent=43 // pred_check
        %p290 = pneg %p116
      $region46: #{_lambda_.9} parent=43 // pred_check_branch
        %292 = sbr.rel (%p290) target = $region48
      $region47: #{_lambda_.9} parent=43 // pred_region
        %p293 = scmp.lt.s32.totalorder %s21, 1
        %s294 = scalar_select %p293, %s21, 1
        %s295 = scalar_lea.vmem %s2, %s294
      $region48: #{_lambda_.9} parent=43 // pred_fallthru
        _
    $region44: #{_lambda_.9} parent=5 // pred_fallthru
      _
  $region6: #{_lambda_.9} parent=0 // loop_footer
    %s12 = sadd.s32 1, %s8
  $region7: #{_lambda_.9} parent=0 // loop_footer_branch
    %7 = sbr.rel target = $region3
  $region8: #{_lambda_.9} parent=0 // loop_exit
    _

</llo_original>
